<compile_context>
chip_gen: v5e
topology: v5e:2x2
jax: 0.10.0
libtpu: 0.0.40
codegen_flags: <defaults>
</compile_context>

<pallas_src>
import jax
import jax.numpy as jnp
from jax.experimental import pallas as pl
from jax.experimental.pallas import tpu as pltpu


# --------------------------------------------------------------------------
# Fused features[:level] kernel (conv3x3 "same" + ReLU chain, all outputs)
# --------------------------------------------------------------------------
def _make_fused_kernel(kinds, H, W):
    """Builds a kernel that runs the static layer prefix `kinds` (conv/relu)."""
    HW = H * W
    n_conv = sum(1 for k in kinds if k == "conv")

    def kernel(*refs):
        x_ref = refs[0]
        conv_refs = refs[1:1 + 2 * n_conv]        # (w_flat, bias) interleaved
        out_refs = refs[1 + 2 * n_conv:]          # one per layer in prefix

        # ---- halo-validity masks over the flattened spatial axis ----------
        # Computed once; shared by every conv layer (H, W identical for all).
        col = jax.lax.broadcasted_iota(jnp.int32, (1, HW), 1)
        colf = col.astype(jnp.float32)
        row_f = jnp.floor(colf / jnp.float32(W))          # h index (exact)
        ww_f = colf - row_f * jnp.float32(W)              # w index (exact)
        cond = {
            "h-": col >= W,                               # h >= 1
            "h+": col < HW - W,                           # h <= H - 2
            "w-": ww_f >= 0.5,                            # w >= 1
            "w+": ww_f <= jnp.float32(W) - 1.5,           # w <= W - 2
        }

        def tap_mask(dh, dw):
            conds = []
            if dh < 0:
                conds.append(cond["h-"])
            if dh > 0:
                conds.append(cond["h+"])
            if dw < 0:
                conds.append(cond["w-"])
            if dw > 0:
                conds.append(cond["w+"])
            if not conds:
                return None
            m = conds[0]
            for c in conds[1:]:
                m = m & c
            return m

        masks = {(dh, dw): tap_mask(dh, dw)
                 for dh in (-1, 0, 1) for dw in (-1, 0, 1)}

        def conv3x3(x, w_ref, b_ref):
            # x: (Cin, HW);  w_ref: (Cout, 9*Cin), K ordered (kh, kw, cin);
            # b_ref: (Cout, 1).  One MXU matmul: K = 9*Cin, N = HW lanes.
            taps = []
            for dh in (-1, 0, 1):
                for dw in (-1, 0, 1):
                    off = dh * W + dw
                    t = x if off == 0 else pltpu.roll(x, (-off) % HW, axis=1)
                    m = masks[(dh, dw)]
                    if m is not None:
                        t = jnp.where(m, t, 0.0)
                    taps.append(t)
            patches = jnp.concatenate(taps, axis=0)        # (9*Cin, HW)
            acc = jnp.dot(w_ref[...], patches,
                          preferred_element_type=jnp.float32)
            return acc + b_ref[...]                        # (Cout, HW)

        x = x_ref[0]                                       # (Cin_pad, HW)
        ci = 0
        for li, kind in enumerate(kinds):
            if kind == "conv":
                x = conv3x3(x, conv_refs[2 * ci], conv_refs[2 * ci + 1])
                ci += 1
            else:                                          # relu
                x = jnp.maximum(x, 0.0)
            out_refs[li][0] = x.astype(out_refs[li].dtype)

    return kernel


def _prep_conv(w_oihw, b, cin_expected):
    """OIHW -> (Cout, 9*cin_expected) with K ordered (kh, kw, cin); bias (Cout,1)."""
    cout, cin, kh, kw = w_oihw.shape
    w_t = jnp.transpose(w_oihw, (0, 2, 3, 1))              # (Cout, KH, KW, Cin)
    if cin_expected != cin:
        w_t = jnp.pad(w_t, ((0, 0), (0, 0), (0, 0), (0, cin_expected - cin)))
    w_flat = w_t.reshape(cout, kh * kw * cin_expected)
    return w_flat, b.reshape(cout, 1)


# --------------------------------------------------------------------------
# Synthetic encoder parameters (deterministic) + SelfFeatureExtractor forward
# --------------------------------------------------------------------------
def init_encoder_params(key, cin=4, widths=(8, 16, 16)):
    """Conv2d weights in PyTorch OIHW layout, bias (Cout,)."""
    params = []
    for cout in widths:
        key, kw_, kb_ = jax.random.split(key, 3)
        fan_in = cin * 9
        w = jax.random.normal(kw_, (cout, cin, 3, 3), jnp.float32) / jnp.sqrt(
            jnp.float32(fan_in))
        b = jax.random.normal(kb_, (cout,), jnp.float32) * 0.01
        params.append((w, b))
        cin = cout
    return params


def _build_layers(params):
    # convolutional_features = Sequential(Conv, ReLU, Conv, ReLU, Conv, ReLU)
    layers = []
    for w, b in params:
        layers.append(("conv", (w, b)))
        layers.append(("relu", None))
    return layers


def self_feature_extractor(x_nchw, params, level=-1):
    """Pallas version of SelfFeatureExtractor.forward (inference only).

    Returns the list of intermediate activations of features[:level],
    each in NCHW layout (matching the PyTorch module).
    """
    layers = _build_layers(params)
    prefix = layers[:level]                  # same slicing semantics as torch
    if not prefix:
        return []

    N, cin, H, W = x_nchw.shape
    HW = H * W

    # Flattened-NCHW activations: (N, C, H*W) — a pure reshape of NCHW.
    # Pad input channels up to a multiple of 8 (matching zero weight rows) so
    # sublane concatenation inside the kernel is tile aligned; the synthesized
    # intermediate widths (8, 16) are already aligned.
    cin_pad = -(-cin // 8) * 8
    x_flat = x_nchw.reshape(N, cin, HW)
    if cin_pad != cin:
        x_flat = jnp.pad(x_flat, ((0, 0), (0, cin_pad - cin), (0, 0)))

    kinds = []
    conv_args = []
    out_channels = []
    c = cin_pad
    for kind, p in prefix:
        kinds.append(kind)
        if kind == "conv":
            w, b = p
            w_flat, b2 = _prep_conv(w, b, c)
            conv_args.extend([w_flat, b2])
            c = w.shape[0]
        out_channels.append(c)

    kernel = _make_fused_kernel(tuple(kinds), H, W)

    in_specs = [pl.BlockSpec((1, cin_pad, HW), lambda n: (n, 0, 0))]
    for a in conv_args:                       # weights/biases: whole array
        in_specs.append(pl.BlockSpec(a.shape, lambda n: (0, 0)))

    out_shape = tuple(jax.ShapeDtypeStruct((N, cc, HW), x_nchw.dtype)
                      for cc in out_channels)
    out_specs = tuple(pl.BlockSpec((1, cc, HW), lambda n: (n, 0, 0))
                      for cc in out_channels)

    outs = pl.pallas_call(
        kernel,
        out_shape=out_shape,
        grid=(N,),
        in_specs=in_specs,
        out_specs=out_specs,
        compiler_params=pltpu.CompilerParams(
            dimension_semantics=("parallel",)),
    )(x_flat, *conv_args)

    # (N, C, H*W) -> (N, C, H, W): dim split only, no transpose / relayout.
    return [o.reshape(N, o.shape[1], H, W) for o in outs]


# --------------------------------------------------------------------------
# Pure-JAX reference of the same forward (for correctness checking)
# --------------------------------------------------------------------------
def _reference(x_nchw, params, level=-1):
    layers = _build_layers(params)
    outs = []
    x = x_nchw
    for kind, p in layers[:level]:
        if kind == "conv":
            w, b = p
            x = jax.lax.conv_general_dilated(
                x, w, window_strides=(1, 1), padding=((1, 1), (1, 1)),
                dimension_numbers=("NCHW", "OIHW", "NCHW"),
            ) + b[None, :, None, None]
        else:
            x = jnp.maximum(x, 0)
        outs.append(x)
    return outs


if __name__ == "__main__":
    key = jax.random.PRNGKey(0)
    kx, kp = jax.random.split(key)

    # Small NCHW input consistent with the module: batch=2, channels=4, 16x16.
    x = jax.random.normal(kx, (2, 4, 16, 16), jnp.float32)
    params = init_encoder_params(kp, cin=4, widths=(8, 16, 16))

    outs = self_feature_extractor(x, params, level=-1)
    outs = [jax.block_until_ready(o) for o in outs]

    refs = _reference(x, params, level=-1)
    assert len(outs) == len(refs) == 5            # features[:-1] -> 5 layers
    for o, r in zip(outs, refs):
        assert o.shape == r.shape and o.dtype == r.dtype
        assert jnp.allclose(o, r, atol=2e-4, rtol=2e-4), \
            float(jnp.max(jnp.abs(o - r)))

    print("KERNEL_OK")
</pallas_src>

<mosaic_0001>
module attributes {stable_mosaic.version = 11 : i64} {
  func.func @kernel(%arg0: i32, %arg1: memref<1x8x256xf32, #tpu.memory_space<vmem>>, %arg2: memref<8x72xf32, #tpu.memory_space<vmem>>, %arg3: memref<8x1xf32, #tpu.memory_space<vmem>>, %arg4: memref<16x72xf32, #tpu.memory_space<vmem>>, %arg5: memref<16x1xf32, #tpu.memory_space<vmem>>, %arg6: memref<16x144xf32, #tpu.memory_space<vmem>>, %arg7: memref<16x1xf32, #tpu.memory_space<vmem>>, %arg8: memref<1x8x256xf32, #tpu.memory_space<vmem>>, %arg9: memref<1x8x256xf32, #tpu.memory_space<vmem>>, %arg10: memref<1x16x256xf32, #tpu.memory_space<vmem>>, %arg11: memref<1x16x256xf32, #tpu.memory_space<vmem>>, %arg12: memref<1x16x256xf32, #tpu.memory_space<vmem>>) attributes {dimension_semantics = [#tpu.dimension_semantics<parallel>], iteration_bounds = array<i64: 2>, scalar_prefetch = 0 : i64, scratch_operands = 0 : i64, tpu.core_type = #tpu.core_type<tc>, window_params = [{transform_indices = @transform_0, window_bounds = array<i64: 1, 8, 256>}, {pipeline_mode = #tpu.pipeline_mode<synchronous>, transform_indices = @transform_1, window_bounds = array<i64: 8, 72>}, {pipeline_mode = #tpu.pipeline_mode<synchronous>, transform_indices = @transform_2, window_bounds = array<i64: 8, 1>}, {pipeline_mode = #tpu.pipeline_mode<synchronous>, transform_indices = @transform_3, window_bounds = array<i64: 16, 72>}, {pipeline_mode = #tpu.pipeline_mode<synchronous>, transform_indices = @transform_4, window_bounds = array<i64: 16, 1>}, {pipeline_mode = #tpu.pipeline_mode<synchronous>, transform_indices = @transform_5, window_bounds = array<i64: 16, 144>}, {pipeline_mode = #tpu.pipeline_mode<synchronous>, transform_indices = @transform_6, window_bounds = array<i64: 16, 1>}, {transform_indices = @transform_7, window_bounds = array<i64: 1, 8, 256>}, {transform_indices = @transform_8, window_bounds = array<i64: 1, 8, 256>}, {transform_indices = @transform_9, window_bounds = array<i64: 1, 16, 256>}, {transform_indices = @transform_10, window_bounds = array<i64: 1, 16, 256>}, {transform_indices = @transform_11, window_bounds = array<i64: 1, 16, 256>}]} {
    %0 = tpu.iota {dimensions = array<i32: 1>} : vector<1x256xi32>
    %1 = arith.sitofp %0 : vector<1x256xi32> to vector<1x256xf32>
    %cst = arith.constant 1.600000e+01 : f32
    %2 = vector.broadcast %cst : f32 to vector<1x256xf32>
    %3 = arith.divf %1, %2 : vector<1x256xf32>
    %4 = math.floor %3 : vector<1x256xf32>
    %cst_0 = arith.constant 1.600000e+01 : f32
    %5 = vector.broadcast %cst_0 : f32 to vector<1x256xf32>
    %6 = arith.mulf %4, %5 : vector<1x256xf32>
    %7 = arith.subf %1, %6 : vector<1x256xf32>
    %c16_i32 = arith.constant 16 : i32
    %8 = vector.broadcast %c16_i32 : i32 to vector<1x256xi32>
    %9 = arith.cmpi sge, %0, %8 : vector<1x256xi32>
    %c240_i32 = arith.constant 240 : i32
    %10 = vector.broadcast %c240_i32 : i32 to vector<1x256xi32>
    %11 = arith.cmpi slt, %0, %10 : vector<1x256xi32>
    %cst_1 = arith.constant 5.000000e-01 : f32
    %12 = vector.broadcast %cst_1 : f32 to vector<1x256xf32>
    %13 = arith.cmpf oge, %7, %12 : vector<1x256xf32>
    %cst_2 = arith.constant 1.600000e+01 : f32
    %cst_3 = arith.constant 1.500000e+00 : f32
    %14 = arith.subf %cst_2, %cst_3 : f32
    %15 = vector.broadcast %14 : f32 to vector<1x256xf32>
    %16 = arith.cmpf ole, %7, %15 : vector<1x256xf32>
    %17 = arith.andi %9, %13 : vector<1x256xi1>
    %18 = arith.andi %9, %16 : vector<1x256xi1>
    %19 = arith.andi %11, %13 : vector<1x256xi1>
    %20 = arith.andi %11, %16 : vector<1x256xi1>
    %c0 = arith.constant 0 : index
    %c0_4 = arith.constant 0 : index
    %c0_5 = arith.constant 0 : index
    %21 = vector.load %arg1[%c0, %c0_4, %c0_5] : memref<1x8x256xf32, #tpu.memory_space<vmem>>, vector<1x8x256xf32>
    %22 = vector.shape_cast %21 : vector<1x8x256xf32> to vector<8x256xf32>
    %c17_i32 = arith.constant 17 : i32
    %23 = tpu.dynamic_rotate %22 by %c17_i32 dim 1 : vector<8x256xf32>, i32 -> vector<8x256xf32>
    %cst_6 = arith.constant 0.000000e+00 : f32
    %24 = vector.shape_cast %17 : vector<1x256xi1> to vector<1x256xi1>
    %25 = vector.broadcast %24 : vector<1x256xi1> to vector<8x256xi1>
    %26 = vector.broadcast %cst_6 : f32 to vector<8x256xf32>
    %27 = arith.select %25, %23, %26 : vector<8x256xi1>, vector<8x256xf32>
    %c16_i32_7 = arith.constant 16 : i32
    %28 = tpu.dynamic_rotate %22 by %c16_i32_7 dim 1 : vector<8x256xf32>, i32 -> vector<8x256xf32>
    %cst_8 = arith.constant 0.000000e+00 : f32
    %29 = vector.shape_cast %9 : vector<1x256xi1> to vector<1x256xi1>
    %30 = vector.broadcast %29 : vector<1x256xi1> to vector<8x256xi1>
    %31 = vector.broadcast %cst_8 : f32 to vector<8x256xf32>
    %32 = arith.select %30, %28, %31 : vector<8x256xi1>, vector<8x256xf32>
    %c15_i32 = arith.constant 15 : i32
    %33 = tpu.dynamic_rotate %22 by %c15_i32 dim 1 : vector<8x256xf32>, i32 -> vector<8x256xf32>
    %cst_9 = arith.constant 0.000000e+00 : f32
    %34 = vector.shape_cast %18 : vector<1x256xi1> to vector<1x256xi1>
    %35 = vector.broadcast %34 : vector<1x256xi1> to vector<8x256xi1>
    %36 = vector.broadcast %cst_9 : f32 to vector<8x256xf32>
    %37 = arith.select %35, %33, %36 : vector<8x256xi1>, vector<8x256xf32>
    %c1_i32 = arith.constant 1 : i32
    %38 = tpu.dynamic_rotate %22 by %c1_i32 dim 1 : vector<8x256xf32>, i32 -> vector<8x256xf32>
    %cst_10 = arith.constant 0.000000e+00 : f32
    %39 = vector.shape_cast %13 : vector<1x256xi1> to vector<1x256xi1>
    %40 = vector.broadcast %39 : vector<1x256xi1> to vector<8x256xi1>
    %41 = vector.broadcast %cst_10 : f32 to vector<8x256xf32>
    %42 = arith.select %40, %38, %41 : vector<8x256xi1>, vector<8x256xf32>
    %c255_i32 = arith.constant 255 : i32
    %43 = tpu.dynamic_rotate %22 by %c255_i32 dim 1 : vector<8x256xf32>, i32 -> vector<8x256xf32>
    %cst_11 = arith.constant 0.000000e+00 : f32
    %44 = vector.shape_cast %16 : vector<1x256xi1> to vector<1x256xi1>
    %45 = vector.broadcast %44 : vector<1x256xi1> to vector<8x256xi1>
    %46 = vector.broadcast %cst_11 : f32 to vector<8x256xf32>
    %47 = arith.select %45, %43, %46 : vector<8x256xi1>, vector<8x256xf32>
    %c241_i32 = arith.constant 241 : i32
    %48 = tpu.dynamic_rotate %22 by %c241_i32 dim 1 : vector<8x256xf32>, i32 -> vector<8x256xf32>
    %cst_12 = arith.constant 0.000000e+00 : f32
    %49 = vector.shape_cast %19 : vector<1x256xi1> to vector<1x256xi1>
    %50 = vector.broadcast %49 : vector<1x256xi1> to vector<8x256xi1>
    %51 = vector.broadcast %cst_12 : f32 to vector<8x256xf32>
    %52 = arith.select %50, %48, %51 : vector<8x256xi1>, vector<8x256xf32>
    %c240_i32_13 = arith.constant 240 : i32
    %53 = tpu.dynamic_rotate %22 by %c240_i32_13 dim 1 : vector<8x256xf32>, i32 -> vector<8x256xf32>
    %cst_14 = arith.constant 0.000000e+00 : f32
    %54 = vector.shape_cast %11 : vector<1x256xi1> to vector<1x256xi1>
    %55 = vector.broadcast %54 : vector<1x256xi1> to vector<8x256xi1>
    %56 = vector.broadcast %cst_14 : f32 to vector<8x256xf32>
    %57 = arith.select %55, %53, %56 : vector<8x256xi1>, vector<8x256xf32>
    %c239_i32 = arith.constant 239 : i32
    %58 = tpu.dynamic_rotate %22 by %c239_i32 dim 1 : vector<8x256xf32>, i32 -> vector<8x256xf32>
    %cst_15 = arith.constant 0.000000e+00 : f32
    %59 = vector.shape_cast %20 : vector<1x256xi1> to vector<1x256xi1>
    %60 = vector.broadcast %59 : vector<1x256xi1> to vector<8x256xi1>
    %61 = vector.broadcast %cst_15 : f32 to vector<8x256xf32>
    %62 = arith.select %60, %58, %61 : vector<8x256xi1>, vector<8x256xf32>
    %63 = tpu.concatenate %27, %32, %37, %42, %22, %47, %52, %57, %62 in 0 : vector<8x256xf32>, vector<8x256xf32>, vector<8x256xf32>, vector<8x256xf32>, vector<8x256xf32>, vector<8x256xf32>, vector<8x256xf32>, vector<8x256xf32>, vector<8x256xf32> -> vector<72x256xf32>
    %c0_16 = arith.constant 0 : index
    %c0_17 = arith.constant 0 : index
    %64 = vector.load %arg2[%c0_16, %c0_17] : memref<8x72xf32, #tpu.memory_space<vmem>>, vector<8x72xf32>
    %cst_18 = arith.constant dense<0.000000e+00> : vector<8x256xf32>
    %65 = tpu.matmul %64, %63, %cst_18 {dimension_numbers = #tpu.dot_dimension_numbers<[1], [0], [0], [1], [0, 0, 1, 1], [], []>} : vector<8x72xf32>, vector<72x256xf32>, vector<8x256xf32> -> vector<8x256xf32>
    %c0_19 = arith.constant 0 : index
    %c0_20 = arith.constant 0 : index
    %66 = vector.load %arg3[%c0_19, %c0_20] : memref<8x1xf32, #tpu.memory_space<vmem>>, vector<8x1xf32>
    %67 = vector.broadcast %66 : vector<8x1xf32> to vector<8x256xf32>
    %68 = arith.addf %65, %67 : vector<8x256xf32>
    %c0_21 = arith.constant 0 : index
    %c0_22 = arith.constant 0 : index
    %c0_23 = arith.constant 0 : index
    %69 = vector.load %arg8[%c0_21, %c0_22, %c0_23] : memref<1x8x256xf32, #tpu.memory_space<vmem>>, vector<1x8x256xf32>
    %70 = vector.shape_cast %69 : vector<1x8x256xf32> to vector<8x256xf32>
    %71 = vector.shape_cast %68 : vector<8x256xf32> to vector<1x8x256xf32>
    tpu.vector_store %arg8[%c0_21, %c0_22, %c0_23], %71 {strides = array<i32>} : memref<1x8x256xf32, #tpu.memory_space<vmem>>, vector<1x8x256xf32>,
    %cst_24 = arith.constant 0.000000e+00 : f32
    %72 = vector.broadcast %cst_24 : f32 to vector<8x256xf32>
    %73 = arith.maximumf %68, %72 : vector<8x256xf32>
    %c0_25 = arith.constant 0 : index
    %c0_26 = arith.constant 0 : index
    %c0_27 = arith.constant 0 : index
    %74 = vector.load %arg9[%c0_25, %c0_26, %c0_27] : memref<1x8x256xf32, #tpu.memory_space<vmem>>, vector<1x8x256xf32>
    %75 = vector.shape_cast %74 : vector<1x8x256xf32> to vector<8x256xf32>
    %76 = vector.shape_cast %73 : vector<8x256xf32> to vector<1x8x256xf32>
    tpu.vector_store %arg9[%c0_25, %c0_26, %c0_27], %76 {strides = array<i32>} : memref<1x8x256xf32, #tpu.memory_space<vmem>>, vector<1x8x256xf32>,
    %c17_i32_28 = arith.constant 17 : i32
    %77 = tpu.dynamic_rotate %73 by %c17_i32_28 dim 1 : vector<8x256xf32>, i32 -> vector<8x256xf32>
    %cst_29 = arith.constant 0.000000e+00 : f32
    %78 = vector.shape_cast %17 : vector<1x256xi1> to vector<1x256xi1>
    %79 = vector.broadcast %78 : vector<1x256xi1> to vector<8x256xi1>
    %80 = vector.broadcast %cst_29 : f32 to vector<8x256xf32>
    %81 = arith.select %79, %77, %80 : vector<8x256xi1>, vector<8x256xf32>
    %c16_i32_30 = arith.constant 16 : i32
    %82 = tpu.dynamic_rotate %73 by %c16_i32_30 dim 1 : vector<8x256xf32>, i32 -> vector<8x256xf32>
    %cst_31 = arith.constant 0.000000e+00 : f32
    %83 = vector.shape_cast %9 : vector<1x256xi1> to vector<1x256xi1>
    %84 = vector.broadcast %83 : vector<1x256xi1> to vector<8x256xi1>
    %85 = vector.broadcast %cst_31 : f32 to vector<8x256xf32>
    %86 = arith.select %84, %82, %85 : vector<8x256xi1>, vector<8x256xf32>
    %c15_i32_32 = arith.constant 15 : i32
    %87 = tpu.dynamic_rotate %73 by %c15_i32_32 dim 1 : vector<8x256xf32>, i32 -> vector<8x256xf32>
    %cst_33 = arith.constant 0.000000e+00 : f32
    %88 = vector.shape_cast %18 : vector<1x256xi1> to vector<1x256xi1>
    %89 = vector.broadcast %88 : vector<1x256xi1> to vector<8x256xi1>
    %90 = vector.broadcast %cst_33 : f32 to vector<8x256xf32>
    %91 = arith.select %89, %87, %90 : vector<8x256xi1>, vector<8x256xf32>
    %c1_i32_34 = arith.constant 1 : i32
    %92 = tpu.dynamic_rotate %73 by %c1_i32_34 dim 1 : vector<8x256xf32>, i32 -> vector<8x256xf32>
    %cst_35 = arith.constant 0.000000e+00 : f32
    %93 = vector.shape_cast %13 : vector<1x256xi1> to vector<1x256xi1>
    %94 = vector.broadcast %93 : vector<1x256xi1> to vector<8x256xi1>
    %95 = vector.broadcast %cst_35 : f32 to vector<8x256xf32>
    %96 = arith.select %94, %92, %95 : vector<8x256xi1>, vector<8x256xf32>
    %c255_i32_36 = arith.constant 255 : i32
    %97 = tpu.dynamic_rotate %73 by %c255_i32_36 dim 1 : vector<8x256xf32>, i32 -> vector<8x256xf32>
    %cst_37 = arith.constant 0.000000e+00 : f32
    %98 = vector.shape_cast %16 : vector<1x256xi1> to vector<1x256xi1>
    %99 = vector.broadcast %98 : vector<1x256xi1> to vector<8x256xi1>
    %100 = vector.broadcast %cst_37 : f32 to vector<8x256xf32>
    %101 = arith.select %99, %97, %100 : vector<8x256xi1>, vector<8x256xf32>
    %c241_i32_38 = arith.constant 241 : i32
    %102 = tpu.dynamic_rotate %73 by %c241_i32_38 dim 1 : vector<8x256xf32>, i32 -> vector<8x256xf32>
    %cst_39 = arith.constant 0.000000e+00 : f32
    %103 = vector.shape_cast %19 : vector<1x256xi1> to vector<1x256xi1>
    %104 = vector.broadcast %103 : vector<1x256xi1> to vector<8x256xi1>
    %105 = vector.broadcast %cst_39 : f32 to vector<8x256xf32>
    %106 = arith.select %104, %102, %105 : vector<8x256xi1>, vector<8x256xf32>
    %c240_i32_40 = arith.constant 240 : i32
    %107 = tpu.dynamic_rotate %73 by %c240_i32_40 dim 1 : vector<8x256xf32>, i32 -> vector<8x256xf32>
    %cst_41 = arith.constant 0.000000e+00 : f32
    %108 = vector.shape_cast %11 : vector<1x256xi1> to vector<1x256xi1>
    %109 = vector.broadcast %108 : vector<1x256xi1> to vector<8x256xi1>
    %110 = vector.broadcast %cst_41 : f32 to vector<8x256xf32>
    %111 = arith.select %109, %107, %110 : vector<8x256xi1>, vector<8x256xf32>
    %c239_i32_42 = arith.constant 239 : i32
    %112 = tpu.dynamic_rotate %73 by %c239_i32_42 dim 1 : vector<8x256xf32>, i32 -> vector<8x256xf32>
    %cst_43 = arith.constant 0.000000e+00 : f32
    %113 = vector.shape_cast %20 : vector<1x256xi1> to vector<1x256xi1>
    %114 = vector.broadcast %113 : vector<1x256xi1> to vector<8x256xi1>
    %115 = vector.broadcast %cst_43 : f32 to vector<8x256xf32>
    %116 = arith.select %114, %112, %115 : vector<8x256xi1>, vector<8x256xf32>
    %117 = tpu.concatenate %81, %86, %91, %96, %73, %101, %106, %111, %116 in 0 : vector<8x256xf32>, vector<8x256xf32>, vector<8x256xf32>, vector<8x256xf32>, vector<8x256xf32>, vector<8x256xf32>, vector<8x256xf32>, vector<8x256xf32>, vector<8x256xf32> -> vector<72x256xf32>
    %c0_44 = arith.constant 0 : index
    %c0_45 = arith.constant 0 : index
    %118 = vector.load %arg4[%c0_44, %c0_45] : memref<16x72xf32, #tpu.memory_space<vmem>>, vector<16x72xf32>
    %cst_46 = arith.constant dense<0.000000e+00> : vector<16x256xf32>
    %119 = tpu.matmul %118, %117, %cst_46 {dimension_numbers = #tpu.dot_dimension_numbers<[1], [0], [0], [1], [0, 0, 1, 1], [], []>} : vector<16x72xf32>, vector<72x256xf32>, vector<16x256xf32> -> vector<16x256xf32>
    %c0_47 = arith.constant 0 : index
    %c0_48 = arith.constant 0 : index
    %120 = vector.load %arg5[%c0_47, %c0_48] : memref<16x1xf32, #tpu.memory_space<vmem>>, vector<16x1xf32>
    %121 = vector.broadcast %120 : vector<16x1xf32> to vector<16x256xf32>
    %122 = arith.addf %119, %121 : vector<16x256xf32>
    %c0_49 = arith.constant 0 : index
    %c0_50 = arith.constant 0 : index
    %c0_51 = arith.constant 0 : index
    %123 = vector.load %arg10[%c0_49, %c0_50, %c0_51] : memref<1x16x256xf32, #tpu.memory_space<vmem>>, vector<1x16x256xf32>
    %124 = vector.shape_cast %123 : vector<1x16x256xf32> to vector<16x256xf32>
    %125 = vector.shape_cast %122 : vector<16x256xf32> to vector<1x16x256xf32>
    tpu.vector_store %arg10[%c0_49, %c0_50, %c0_51], %125 {strides = array<i32>} : memref<1x16x256xf32, #tpu.memory_space<vmem>>, vector<1x16x256xf32>,
    %cst_52 = arith.constant 0.000000e+00 : f32
    %126 = vector.broadcast %cst_52 : f32 to vector<16x256xf32>
    %127 = arith.maximumf %122, %126 : vector<16x256xf32>
    %c0_53 = arith.constant 0 : index
    %c0_54 = arith.constant 0 : index
    %c0_55 = arith.constant 0 : index
    %128 = vector.load %arg11[%c0_53, %c0_54, %c0_55] : memref<1x16x256xf32, #tpu.memory_space<vmem>>, vector<1x16x256xf32>
    %129 = vector.shape_cast %128 : vector<1x16x256xf32> to vector<16x256xf32>
    %130 = vector.shape_cast %127 : vector<16x256xf32> to vector<1x16x256xf32>
    tpu.vector_store %arg11[%c0_53, %c0_54, %c0_55], %130 {strides = array<i32>} : memref<1x16x256xf32, #tpu.memory_space<vmem>>, vector<1x16x256xf32>,
    %c17_i32_56 = arith.constant 17 : i32
    %131 = tpu.dynamic_rotate %127 by %c17_i32_56 dim 1 : vector<16x256xf32>, i32 -> vector<16x256xf32>
    %cst_57 = arith.constant 0.000000e+00 : f32
    %132 = vector.shape_cast %17 : vector<1x256xi1> to vector<1x256xi1>
    %133 = vector.broadcast %132 : vector<1x256xi1> to vector<16x256xi1>
    %134 = vector.broadcast %cst_57 : f32 to vector<16x256xf32>
    %135 = arith.select %133, %131, %134 : vector<16x256xi1>, vector<16x256xf32>
    %c16_i32_58 = arith.constant 16 : i32
    %136 = tpu.dynamic_rotate %127 by %c16_i32_58 dim 1 : vector<16x256xf32>, i32 -> vector<16x256xf32>
    %cst_59 = arith.constant 0.000000e+00 : f32
    %137 = vector.shape_cast %9 : vector<1x256xi1> to vector<1x256xi1>
    %138 = vector.broadcast %137 : vector<1x256xi1> to vector<16x256xi1>
    %139 = vector.broadcast %cst_59 : f32 to vector<16x256xf32>
    %140 = arith.select %138, %136, %139 : vector<16x256xi1>, vector<16x256xf32>
    %c15_i32_60 = arith.constant 15 : i32
    %141 = tpu.dynamic_rotate %127 by %c15_i32_60 dim 1 : vector<16x256xf32>, i32 -> vector<16x256xf32>
    %cst_61 = arith.constant 0.000000e+00 : f32
    %142 = vector.shape_cast %18 : vector<1x256xi1> to vector<1x256xi1>
    %143 = vector.broadcast %142 : vector<1x256xi1> to vector<16x256xi1>
    %144 = vector.broadcast %cst_61 : f32 to vector<16x256xf32>
    %145 = arith.select %143, %141, %144 : vector<16x256xi1>, vector<16x256xf32>
    %c1_i32_62 = arith.constant 1 : i32
    %146 = tpu.dynamic_rotate %127 by %c1_i32_62 dim 1 : vector<16x256xf32>, i32 -> vector<16x256xf32>
    %cst_63 = arith.constant 0.000000e+00 : f32
    %147 = vector.shape_cast %13 : vector<1x256xi1> to vector<1x256xi1>
    %148 = vector.broadcast %147 : vector<1x256xi1> to vector<16x256xi1>
    %149 = vector.broadcast %cst_63 : f32 to vector<16x256xf32>
    %150 = arith.select %148, %146, %149 : vector<16x256xi1>, vector<16x256xf32>
    %c255_i32_64 = arith.constant 255 : i32
    %151 = tpu.dynamic_rotate %127 by %c255_i32_64 dim 1 : vector<16x256xf32>, i32 -> vector<16x256xf32>
    %cst_65 = arith.constant 0.000000e+00 : f32
    %152 = vector.shape_cast %16 : vector<1x256xi1> to vector<1x256xi1>
    %153 = vector.broadcast %152 : vector<1x256xi1> to vector<16x256xi1>
    %154 = vector.broadcast %cst_65 : f32 to vector<16x256xf32>
    %155 = arith.select %153, %151, %154 : vector<16x256xi1>, vector<16x256xf32>
    %c241_i32_66 = arith.constant 241 : i32
    %156 = tpu.dynamic_rotate %127 by %c241_i32_66 dim 1 : vector<16x256xf32>, i32 -> vector<16x256xf32>
    %cst_67 = arith.constant 0.000000e+00 : f32
    %157 = vector.shape_cast %19 : vector<1x256xi1> to vector<1x256xi1>
    %158 = vector.broadcast %157 : vector<1x256xi1> to vector<16x256xi1>
    %159 = vector.broadcast %cst_67 : f32 to vector<16x256xf32>
    %160 = arith.select %158, %156, %159 : vector<16x256xi1>, vector<16x256xf32>
    %c240_i32_68 = arith.constant 240 : i32
    %161 = tpu.dynamic_rotate %127 by %c240_i32_68 dim 1 : vector<16x256xf32>, i32 -> vector<16x256xf32>
    %cst_69 = arith.constant 0.000000e+00 : f32
    %162 = vector.shape_cast %11 : vector<1x256xi1> to vector<1x256xi1>
    %163 = vector.broadcast %162 : vector<1x256xi1> to vector<16x256xi1>
    %164 = vector.broadcast %cst_69 : f32 to vector<16x256xf32>
    %165 = arith.select %163, %161, %164 : vector<16x256xi1>, vector<16x256xf32>
    %c239_i32_70 = arith.constant 239 : i32
    %166 = tpu.dynamic_rotate %127 by %c239_i32_70 dim 1 : vector<16x256xf32>, i32 -> vector<16x256xf32>
    %cst_71 = arith.constant 0.000000e+00 : f32
    %167 = vector.shape_cast %20 : vector<1x256xi1> to vector<1x256xi1>
    %168 = vector.broadcast %167 : vector<1x256xi1> to vector<16x256xi1>
    %169 = vector.broadcast %cst_71 : f32 to vector<16x256xf32>
    %170 = arith.select %168, %166, %169 : vector<16x256xi1>, vector<16x256xf32>
    %171 = tpu.concatenate %135, %140, %145, %150, %127, %155, %160, %165, %170 in 0 : vector<16x256xf32>, vector<16x256xf32>, vector<16x256xf32>, vector<16x256xf32>, vector<16x256xf32>, vector<16x256xf32>, vector<16x256xf32>, vector<16x256xf32>, vector<16x256xf32> -> vector<144x256xf32>
    %c0_72 = arith.constant 0 : index
    %c0_73 = arith.constant 0 : index
    %172 = vector.load %arg6[%c0_72, %c0_73] : memref<16x144xf32, #tpu.memory_space<vmem>>, vector<16x144xf32>
    %cst_74 = arith.constant dense<0.000000e+00> : vector<16x256xf32>
    %173 = tpu.matmul %172, %171, %cst_74 {dimension_numbers = #tpu.dot_dimension_numbers<[1], [0], [0], [1], [0, 0, 1, 1], [], []>} : vector<16x144xf32>, vector<144x256xf32>, vector<16x256xf32> -> vector<16x256xf32>
    %c0_75 = arith.constant 0 : index
    %c0_76 = arith.constant 0 : index
    %174 = vector.load %arg7[%c0_75, %c0_76] : memref<16x1xf32, #tpu.memory_space<vmem>>, vector<16x1xf32>
    %175 = vector.broadcast %174 : vector<16x1xf32> to vector<16x256xf32>
    %176 = arith.addf %173, %175 : vector<16x256xf32>
    %c0_77 = arith.constant 0 : index
    %c0_78 = arith.constant 0 : index
    %c0_79 = arith.constant 0 : index
    %177 = vector.load %arg12[%c0_77, %c0_78, %c0_79] : memref<1x16x256xf32, #tpu.memory_space<vmem>>, vector<1x16x256xf32>
    %178 = vector.shape_cast %177 : vector<1x16x256xf32> to vector<16x256xf32>
    %179 = vector.shape_cast %176 : vector<16x256xf32> to vector<1x16x256xf32>
    tpu.vector_store %arg12[%c0_77, %c0_78, %c0_79], %179 {strides = array<i32>} : memref<1x16x256xf32, #tpu.memory_space<vmem>>, vector<1x16x256xf32>,
    return
  }
  func.func @transform_0(%arg0: i32) -> (i32, i32, i32) {
    %c0_i32 = arith.constant 0 : i32
    %c0_i32_0 = arith.constant 0 : i32
    %c0_i32_1 = arith.constant 0 : i32
    return %arg0, %c0_i32, %c0_i32_0 : i32, i32, i32
  }
  func.func @transform_1(%arg0: i32) -> (i32, i32) {
    %c0_i32 = arith.constant 0 : i32
    %c0_i32_0 = arith.constant 0 : i32
    %c0_i32_1 = arith.constant 0 : i32
    return %c0_i32, %c0_i32_0 : i32, i32
  }
  func.func @transform_2(%arg0: i32) -> (i32, i32) {
    %c0_i32 = arith.constant 0 : i32
    %c0_i32_0 = arith.constant 0 : i32
    %c0_i32_1 = arith.constant 0 : i32
    return %c0_i32, %c0_i32_0 : i32, i32
  }
  func.func @transform_3(%arg0: i32) -> (i32, i32) {
    %c0_i32 = arith.constant 0 : i32
    %c0_i32_0 = arith.constant 0 : i32
    %c0_i32_1 = arith.constant 0 : i32
    return %c0_i32, %c0_i32_0 : i32, i32
  }
  func.func @transform_4(%arg0: i32) -> (i32, i32) {
    %c0_i32 = arith.constant 0 : i32
    %c0_i32_0 = arith.constant 0 : i32
    %c0_i32_1 = arith.constant 0 : i32
    return %c0_i32, %c0_i32_0 : i32, i32
  }
  func.func @transform_5(%arg0: i32) -> (i32, i32) {
    %c0_i32 = arith.constant 0 : i32
    %c0_i32_0 = arith.constant 0 : i32
    %c0_i32_1 = arith.constant 0 : i32
    return %c0_i32, %c0_i32_0 : i32, i32
  }
  func.func @transform_6(%arg0: i32) -> (i32, i32) {
    %c0_i32 = arith.constant 0 : i32
    %c0_i32_0 = arith.constant 0 : i32
    %c0_i32_1 = arith.constant 0 : i32
    return %c0_i32, %c0_i32_0 : i32, i32
  }
  func.func @transform_7(%arg0: i32) -> (i32, i32, i32) {
    %c0_i32 = arith.constant 0 : i32
    %c0_i32_0 = arith.constant 0 : i32
    %c0_i32_1 = arith.constant 0 : i32
    return %arg0, %c0_i32, %c0_i32_0 : i32, i32, i32
  }
  func.func @transform_8(%arg0: i32) -> (i32, i32, i32) {
    %c0_i32 = arith.constant 0 : i32
    %c0_i32_0 = arith.constant 0 : i32
    %c0_i32_1 = arith.constant 0 : i32
    return %arg0, %c0_i32, %c0_i32_0 : i32, i32, i32
  }
  func.func @transform_9(%arg0: i32) -> (i32, i32, i32) {
    %c0_i32 = arith.constant 0 : i32
    %c0_i32_0 = arith.constant 0 : i32
    %c0_i32_1 = arith.constant 0 : i32
    return %arg0, %c0_i32, %c0_i32_0 : i32, i32, i32
  }
  func.func @transform_10(%arg0: i32) -> (i32, i32, i32) {
    %c0_i32 = arith.constant 0 : i32
    %c0_i32_0 = arith.constant 0 : i32
    %c0_i32_1 = arith.constant 0 : i32
    return %arg0, %c0_i32, %c0_i32_0 : i32, i32, i32
  }
  func.func @transform_11(%arg0: i32) -> (i32, i32, i32) {
    %c0_i32 = arith.constant 0 : i32
    %c0_i32_0 = arith.constant 0 : i32
    %c0_i32_1 = arith.constant 0 : i32
    return %arg0, %c0_i32, %c0_i32_0 : i32, i32, i32
  }
}

</mosaic_0001>

<llo_original>
// kernel: tpu_custom_call.1
$region0: #{tpu_custom_call.1}
  #allocation0 [shape = 'u32[]', space=smem, size = 0x4, offset = 0x4, fixed_abs, tag = 'smem constant byte address 0x4 - core index']
  #allocation1 [shape = 'u32[72,128]{1,0:T(1,128)}', space=vmem, size = 0x9000, scoped, tag = 'internal scratch']
  %s0 = inlined_call_operand.vmem [shape: f32[2,8,256], index: 0, kind: input, shape index: {}]
  %s1 = inlined_call_operand.vmem [shape: f32[8,72], index: 1, kind: input, shape index: {}]
  %s2 = inlined_call_operand.vmem [shape: f32[8,1], index: 2, kind: input, shape index: {}]
  %s3 = inlined_call_operand.hbm [shape: f32[16,72], index: 3, kind: input, shape index: {}]
  %s4 = inlined_call_operand.vmem [shape: f32[16,1], index: 4, kind: input, shape index: {}]
  %s5 = inlined_call_operand.hbm [shape: f32[16,144], index: 5, kind: input, shape index: {}]
  %s6 = inlined_call_operand.vmem [shape: f32[16,1], index: 6, kind: input, shape index: {}]
  %s7 = inlined_call_operand.hbm [shape: f32[2,8,256], index: 7, kind: output, shape index: {0}]
  %s8 = inlined_call_operand.hbm [shape: f32[2,8,256], index: 8, kind: output, shape index: {1}]
  %s9 = inlined_call_operand.hbm [shape: f32[2,16,256], index: 9, kind: output, shape index: {2}]
  %s10 = inlined_call_operand.hbm [shape: f32[2,16,256], index: 10, kind: output, shape index: {3}]
  %s11 = inlined_call_operand.hbm [shape: f32[2,16,256], index: 11, kind: output, shape index: {4}]
  %12 = xla_tuple %s7, %s8, %s9, %s10, %s11
  %s13 = sld [smem:[#allocation0]]
  $region101: #{tpu_custom_call.1} parent=0
    _
  %s15 = ssub.s32 1, %s13
  %s16 = scalar_select 0, %s15, %s13
  $region1: #{tpu_custom_call.1} parent=0
    #allocation2 [shape = 'u8[8192]{0}', space=vmem, size = 0x2000, scoped, tag = 'input window, operand 3, single buffered']
    #allocation3 [shape = 's32[2]{0}', space=sflag, size = 0x8, scoped, tag = 'scoped memory for tpu_custom_call.1']
    #allocation4 [shape = 's32[2]{0}', space=sflag, size = 0x8, scoped, tag = 'scoped memory for tpu_custom_call.1']
    #allocation5 [shape = 'u8[16384]{0}', space=vmem, size = 0x4000, scoped, tag = 'input window, operand 5, single buffered']
    #allocation6 [shape = 's32[1]{0}', space=sflag, size = 0x4, scoped, tag = 'scoped memory for tpu_custom_call.1']
    #allocation7 [shape = 'u8[16384]{0}', space=vmem, size = 0x4000, scoped, tag = 'output window, operand 0']
    #allocation8 [shape = 'u8[16384]{0}', space=vmem, size = 0x4000, scoped, tag = 'output window, operand 1']
    #allocation9 [shape = 's32[2]{0}', space=sflag, size = 0x8, scoped, tag = 'scoped memory for tpu_custom_call.1']
    #allocation10 [shape = 'u8[32768]{0}', space=vmem, size = 0x8000, scoped, tag = 'output window, operand 2']
    #allocation11 [shape = 'u8[32768]{0}', space=vmem, size = 0x8000, scoped, tag = 'output window, operand 3']
    #allocation12 [shape = 's32[2]{0}', space=sflag, size = 0x8, scoped, tag = 'scoped memory for tpu_custom_call.1']
    #allocation13 [shape = 'u8[32768]{0}', space=vmem, size = 0x8000, scoped, tag = 'output window, operand 4']
    %17 = vsyncpa [#allocation3], 0
    %18 = vsyncpa [#allocation6], 0
    %19 = vsyncpa [#allocation4], 0
    %s20 = scalar_lea.sflag [#allocation4], 1
    %21 = vsyncpa %s20, 0
    %22 = vsyncpa [#allocation9], 0
    %s23 = scalar_lea.sflag [#allocation9], 1
    %24 = vsyncpa %s23, 0
    %25 = vsyncpa [#allocation12], 0
    %s26 = scalar_lea.sflag [#allocation12], 1
    %27 = vsyncpa %s26, 0
    loop: start=0, step=1, limit=4
    $region2: #{tpu_custom_call.1} parent=1 // loop_pre_header
      _
    $region3: #{tpu_custom_call.1} parent=1 // loop_header
      %s29 = sphi 0, %s33
      %p30 = scmp.ge.s32.totalorder %s29, 4
      %s39 = sphi 0, %s41
      %s42 = sphi 0, %s39
      %s43 = sphi 0, %s42
      %s59 = sphi 0, %s43
      %s63 = sphi 0, %s63
      %s65 = sphi 0, %s63
      %s66 = sphi 0, %s65
      %s80 = sphi 0, %s66
      %s84 = sphi 0, %s84
      %s86 = sphi 0, %s84
      %s87 = sphi 0, %s86
      %s101 = sphi 0, %s87
      %s105 = sphi 0, %s105
      %s107 = sphi 0, %s105
      %s108 = sphi 0, %s107
      %s122 = sphi 0, %s108
      %s126 = sphi 0, %s126
      %s128 = sphi 0, %s126
      %s129 = sphi 0, %s128
      %s143 = sphi 0, %s129
      %s147 = sphi 0, %s147
      %s149 = sphi 0, %s147
      %s150 = sphi 0, %s149
      %s164 = sphi 0, %s150
      %s168 = sphi 0, %s168
      %s170 = sphi 0, %s168
      %s171 = sphi 0, %s170
      %s185 = sphi 0, %s171
      %s191 = sphi 0, %s193
      %s194 = sphi 0, %s191
      %s195 = sphi 0, %s194
      %s211 = sphi 0, %s195
      %s217 = sphi 0, %s219
      %s220 = sphi 0, %s217
      %s221 = sphi 0, %s220
      %s237 = sphi 0, %s221
      %s243 = sphi 0, %s245
      %s246 = sphi 0, %s243
      %s247 = sphi 0, %s246
      %s263 = sphi 0, %s247
      %s269 = sphi 0, %s271
      %s272 = sphi 0, %s269
      %s273 = sphi 0, %s272
      %s289 = sphi 0, %s273
      %s295 = sphi 0, %s297
      %s298 = sphi 0, %s295
      %s299 = sphi 0, %s298
      %s315 = sphi 0, %s299
    $region4: #{tpu_custom_call.1} parent=1 // loop_header_branch
      %32 = sbr.rel (%p30) target = $region8
    $region5: #{tpu_custom_call.1} parent=1 // loop_body
      %s34 = ssub.s32 %s29, 1
      %s35 = ssub.s32 %s29, 2
      %s36 = sadd.s32 %s29, 1
      %s37 = ssub.s32 %s29, %s36
      %p38 = scmp.eq.s32.totalorder %s37, 0
      %s40 = sadd.s32 %s39, 1
      %s41 = scalar_select %p38, %s39, %s40
      %p44 = pneg %p38
      %p45 = scmp.eq.s32.totalorder %s29, 1
      %p46 = por %p44, %p45
      %p47 = scmp.ne.s32.totalorder %s39, %s42
      %p48 = scmp.eq.s32.totalorder %s29, 0
      %p49 = por %p47, %p48
      %p50 = scmp.ne.s32.totalorder %s39, %s42
      %p51 = scmp.eq.s32.totalorder %s34, 1
      %p52 = por %p50, %p51
      %p53 = scmp.ne.s32.totalorder %s42, %s43
      %p54 = scmp.eq.s32.totalorder %s34, 0
      %p55 = por %p53, %p54
      %p56 = scmp.ne.s32.totalorder %s42, %s43
      %p57 = scmp.eq.s32.totalorder %s35, 1
      %p58 = por %p56, %p57
      %p60 = scmp.ne.s32.totalorder %s43, %s59
      %p61 = scmp.eq.s32.totalorder %s35, 0
      %p62 = por %p60, %p61
      %s64 = sadd.s32 %s63, 1
      %p67 = scmp.eq.s32.totalorder %s29, 1
      %p68 = scmp.ne.s32.totalorder %s63, %s65
      %p69 = scmp.eq.s32.totalorder %s29, 0
      %p70 = por %p68, %p69
      %p71 = scmp.ne.s32.totalorder %s63, %s65
      %p72 = scmp.eq.s32.totalorder %s34, 1
      %p73 = por %p71, %p72
      %p74 = scmp.ne.s32.totalorder %s65, %s66
      %p75 = scmp.eq.s32.totalorder %s34, 0
      %p76 = por %p74, %p75
      %p77 = scmp.ne.s32.totalorder %s65, %s66
      %p78 = scmp.eq.s32.totalorder %s35, 1
      %p79 = por %p77, %p78
      %p81 = scmp.ne.s32.totalorder %s66, %s80
      %p82 = scmp.eq.s32.totalorder %s35, 0
      %p83 = por %p81, %p82
      %s85 = sadd.s32 %s84, 1
      %p88 = scmp.eq.s32.totalorder %s29, 1
      %p89 = scmp.ne.s32.totalorder %s84, %s86
      %p90 = scmp.eq.s32.totalorder %s29, 0
      %p91 = por %p89, %p90
      %p92 = scmp.ne.s32.totalorder %s84, %s86
      %p93 = scmp.eq.s32.totalorder %s34, 1
      %p94 = por %p92, %p93
      %p95 = scmp.ne.s32.totalorder %s86, %s87
      %p96 = scmp.eq.s32.totalorder %s34, 0
      %p97 = por %p95, %p96
      %p98 = scmp.ne.s32.totalorder %s86, %s87
      %p99 = scmp.eq.s32.totalorder %s35, 1
      %p100 = por %p98, %p99
      %p102 = scmp.ne.s32.totalorder %s87, %s101
      %p103 = scmp.eq.s32.totalorder %s35, 0
      %p104 = por %p102, %p103
      %s106 = sadd.s32 %s105, 1
      %p109 = scmp.eq.s32.totalorder %s29, 1
      %p110 = scmp.ne.s32.totalorder %s105, %s107
      %p111 = scmp.eq.s32.totalorder %s29, 0
      %p112 = por %p110, %p111
      %p113 = scmp.ne.s32.totalorder %s105, %s107
      %p114 = scmp.eq.s32.totalorder %s34, 1
      %p115 = por %p113, %p114
      %p116 = scmp.ne.s32.totalorder %s107, %s108
      %p117 = scmp.eq.s32.totalorder %s34, 0
      %p118 = por %p116, %p117
      %p119 = scmp.ne.s32.totalorder %s107, %s108
      %p120 = scmp.eq.s32.totalorder %s35, 1
      %p121 = por %p119, %p120
      %p123 = scmp.ne.s32.totalorder %s108, %s122
      %p124 = scmp.eq.s32.totalorder %s35, 0
      %p125 = por %p123, %p124
      %s127 = sadd.s32 %s126, 1
      %p130 = scmp.eq.s32.totalorder %s29, 1
      %p131 = scmp.ne.s32.totalorder %s126, %s128
      %p132 = scmp.eq.s32.totalorder %s29, 0
      %p133 = por %p131, %p132
      %p134 = scmp.ne.s32.totalorder %s126, %s128
      %p135 = scmp.eq.s32.totalorder %s34, 1
      %p136 = por %p134, %p135
      %p137 = scmp.ne.s32.totalorder %s128, %s129
      %p138 = scmp.eq.s32.totalorder %s34, 0
      %p139 = por %p137, %p138
      %p140 = scmp.ne.s32.totalorder %s128, %s129
      %p141 = scmp.eq.s32.totalorder %s35, 1
      %p142 = por %p140, %p141
      %p144 = scmp.ne.s32.totalorder %s129, %s143
      %p145 = scmp.eq.s32.totalorder %s35, 0
      %p146 = por %p144, %p145
      %s148 = sadd.s32 %s147, 1
      %p151 = scmp.eq.s32.totalorder %s29, 1
      %p152 = scmp.ne.s32.totalorder %s147, %s149
      %p153 = scmp.eq.s32.totalorder %s29, 0
      %p154 = por %p152, %p153
      %p155 = scmp.ne.s32.totalorder %s147, %s149
      %p156 = scmp.eq.s32.totalorder %s34, 1
      %p157 = por %p155, %p156
      %p158 = scmp.ne.s32.totalorder %s149, %s150
      %p159 = scmp.eq.s32.totalorder %s34, 0
      %p160 = por %p158, %p159
      %p161 = scmp.ne.s32.totalorder %s149, %s150
      %p162 = scmp.eq.s32.totalorder %s35, 1
      %p163 = por %p161, %p162
      %p165 = scmp.ne.s32.totalorder %s150, %s164
      %p166 = scmp.eq.s32.totalorder %s35, 0
      %p167 = por %p165, %p166
      %s169 = sadd.s32 %s168, 1
      %p172 = scmp.eq.s32.totalorder %s29, 1
      %p173 = scmp.ne.s32.totalorder %s168, %s170
      %p174 = scmp.eq.s32.totalorder %s29, 0
      %p175 = por %p173, %p174
      %p176 = scmp.ne.s32.totalorder %s168, %s170
      %p177 = scmp.eq.s32.totalorder %s34, 1
      %p178 = por %p176, %p177
      %p179 = scmp.ne.s32.totalorder %s170, %s171
      %p180 = scmp.eq.s32.totalorder %s34, 0
      %p181 = por %p179, %p180
      %p182 = scmp.ne.s32.totalorder %s170, %s171
      %p183 = scmp.eq.s32.totalorder %s35, 1
      %p184 = por %p182, %p183
      %p186 = scmp.ne.s32.totalorder %s171, %s185
      %p187 = scmp.eq.s32.totalorder %s35, 0
      %p188 = por %p186, %p187
      %s189 = ssub.s32 %s29, %s36
      %p190 = scmp.eq.s32.totalorder %s189, 0
      %s192 = sadd.s32 %s191, 1
      %s193 = scalar_select %p190, %s191, %s192
      %p196 = pneg %p190
      %p197 = scmp.eq.s32.totalorder %s29, 1
      %p198 = por %p196, %p197
      %p199 = scmp.ne.s32.totalorder %s191, %s194
      %p200 = scmp.eq.s32.totalorder %s29, 0
      %p201 = por %p199, %p200
      %p202 = scmp.ne.s32.totalorder %s191, %s194
      %p203 = scmp.eq.s32.totalorder %s34, 1
      %p204 = por %p202, %p203
      %p205 = scmp.ne.s32.totalorder %s194, %s195
      %p206 = scmp.eq.s32.totalorder %s34, 0
      %p207 = por %p205, %p206
      %p208 = scmp.ne.s32.totalorder %s194, %s195
      %p209 = scmp.eq.s32.totalorder %s35, 1
      %p210 = por %p208, %p209
      %p212 = scmp.ne.s32.totalorder %s195, %s211
      %p213 = scmp.eq.s32.totalorder %s35, 0
      %p214 = por %p212, %p213
      %s215 = ssub.s32 %s29, %s36
      %p216 = scmp.eq.s32.totalorder %s215, 0
      %s218 = sadd.s32 %s217, 1
      %s219 = scalar_select %p216, %s217, %s218
      %p222 = pneg %p216
      %p223 = scmp.eq.s32.totalorder %s29, 1
      %p224 = por %p222, %p223
      %p225 = scmp.ne.s32.totalorder %s217, %s220
      %p226 = scmp.eq.s32.totalorder %s29, 0
      %p227 = por %p225, %p226
      %p228 = scmp.ne.s32.totalorder %s217, %s220
      %p229 = scmp.eq.s32.totalorder %s34, 1
      %p230 = por %p228, %p229
      %p231 = scmp.ne.s32.totalorder %s220, %s221
      %p232 = scmp.eq.s32.totalorder %s34, 0
      %p233 = por %p231, %p232
      %p234 = scmp.ne.s32.totalorder %s220, %s221
      %p235 = scmp.eq.s32.totalorder %s35, 1
      %p236 = por %p234, %p235
      %p238 = scmp.ne.s32.totalorder %s221, %s237
      %p239 = scmp.eq.s32.totalorder %s35, 0
      %p240 = por %p238, %p239
      %s241 = ssub.s32 %s29, %s36
      %p242 = scmp.eq.s32.totalorder %s241, 0
      %s244 = sadd.s32 %s243, 1
      %s245 = scalar_select %p242, %s243, %s244
      %p248 = pneg %p242
      %p249 = scmp.eq.s32.totalorder %s29, 1
      %p250 = por %p248, %p249
      %p251 = scmp.ne.s32.totalorder %s243, %s246
      %p252 = scmp.eq.s32.totalorder %s29, 0
      %p253 = por %p251, %p252
      %p254 = scmp.ne.s32.totalorder %s243, %s246
      %p255 = scmp.eq.s32.totalorder %s34, 1
      %p256 = por %p254, %p255
      %p257 = scmp.ne.s32.totalorder %s246, %s247
      %p258 = scmp.eq.s32.totalorder %s34, 0
      %p259 = por %p257, %p258
      %p260 = scmp.ne.s32.totalorder %s246, %s247
      %p261 = scmp.eq.s32.totalorder %s35, 1
      %p262 = por %p260, %p261
      %p264 = scmp.ne.s32.totalorder %s247, %s263
      %p265 = scmp.eq.s32.totalorder %s35, 0
      %p266 = por %p264, %p265
      %s267 = ssub.s32 %s29, %s36
      %p268 = scmp.eq.s32.totalorder %s267, 0
      %s270 = sadd.s32 %s269, 1
      %s271 = scalar_select %p268, %s269, %s270
      %p274 = pneg %p268
      %p275 = scmp.eq.s32.totalorder %s29, 1
      %p276 = por %p274, %p275
      %p277 = scmp.ne.s32.totalorder %s269, %s272
      %p278 = scmp.eq.s32.totalorder %s29, 0
      %p279 = por %p277, %p278
      %p280 = scmp.ne.s32.totalorder %s269, %s272
      %p281 = scmp.eq.s32.totalorder %s34, 1
      %p282 = por %p280, %p281
      %p283 = scmp.ne.s32.totalorder %s272, %s273
      %p284 = scmp.eq.s32.totalorder %s34, 0
      %p285 = por %p283, %p284
      %p286 = scmp.ne.s32.totalorder %s272, %s273
      %p287 = scmp.eq.s32.totalorder %s35, 1
      %p288 = por %p286, %p287
      %p290 = scmp.ne.s32.totalorder %s273, %s289
      %p291 = scmp.eq.s32.totalorder %s35, 0
      %p292 = por %p290, %p291
      %s293 = ssub.s32 %s29, %s36
      %p294 = scmp.eq.s32.totalorder %s293, 0
      %s296 = sadd.s32 %s295, 1
      %s297 = scalar_select %p294, %s295, %s296
      %p300 = pneg %p294
      %p301 = scmp.eq.s32.totalorder %s29, 1
      %p302 = por %p300, %p301
      %p303 = scmp.ne.s32.totalorder %s295, %s298
      %p304 = scmp.eq.s32.totalorder %s29, 0
      %p305 = por %p303, %p304
      %p306 = scmp.ne.s32.totalorder %s295, %s298
      %p307 = scmp.eq.s32.totalorder %s34, 1
      %p308 = por %p306, %p307
      %p309 = scmp.ne.s32.totalorder %s298, %s299
      %p310 = scmp.eq.s32.totalorder %s34, 0
      %p311 = por %p309, %p310
      %p312 = scmp.ne.s32.totalorder %s298, %s299
      %p313 = scmp.eq.s32.totalorder %s35, 1
      %p314 = por %p312, %p313
      %p316 = scmp.ne.s32.totalorder %s299, %s315
      %p317 = scmp.eq.s32.totalorder %s35, 0
      %p318 = por %p316, %p317
      %p319 = scmp.le.s32.totalorder 1, %s29
      %p320 = scmp.lt.s32.totalorder %s29, 3
      %p321 = pnand %p319, %p320
      %p322 = pneg %p321
      // Predicated region
      $region9: #{tpu_custom_call.1} parent=5 // pred_check
        _
      $region10: #{tpu_custom_call.1} parent=5 // pred_check_branch
        %324 = sbr.rel (%p321) target = $region12
      $region11: #{tpu_custom_call.1} parent=5 // pred_region
        %s325 = ssub.s32 %s29, 1
        // Predicated region
        $region13: #{tpu_custom_call.1} parent=11 // pred_check
          %p326 = pneg %p76
        $region14: #{tpu_custom_call.1} parent=11 // pred_check_branch
          %328 = sbr.rel (%p326) target = $region16
        $region15: #{tpu_custom_call.1} parent=11 // pred_region
          _
        $region16: #{tpu_custom_call.1} parent=11 // pred_fallthru
          _
        // Predicated region
        $region17: #{tpu_custom_call.1} parent=11 // pred_check
          %p329 = pneg %p97
        $region18: #{tpu_custom_call.1} parent=11 // pred_check_branch
          %331 = sbr.rel (%p329) target = $region20
        $region19: #{tpu_custom_call.1} parent=11 // pred_region
          _
        $region20: #{tpu_custom_call.1} parent=11 // pred_fallthru
          _
        // Predicated region
        $region21: #{tpu_custom_call.1} parent=11 // pred_check
          %p332 = pneg %p118
        $region22: #{tpu_custom_call.1} parent=11 // pred_check_branch
          %334 = sbr.rel (%p332) target = $region24
        $region23: #{tpu_custom_call.1} parent=11 // pred_region
          %336 = vsyncadd [#allocation3], 0
          %s337 = sshll.u32 %s3, 4
          %s338 = int_to_ptr.hbm [resolvable:$true] %s337
          %s339 = sshll.u32 [#allocation2], 4
          %s340 = int_to_ptr.vmem [resolvable:$true] %s339
          %345 = dma.hbm_to_vmem [thread:$0]  %s338, 256, %s340, [#allocation3], 128, 128, 8
        $region24: #{tpu_custom_call.1} parent=11 // pred_fallthru
          _
        // Predicated region
        $region25: #{tpu_custom_call.1} parent=11 // pred_check
          %p346 = pneg %p139
        $region26: #{tpu_custom_call.1} parent=11 // pred_check_branch
          %348 = sbr.rel (%p346) target = $region28
        $region27: #{tpu_custom_call.1} parent=11 // pred_region
          _
        $region28: #{tpu_custom_call.1} parent=11 // pred_fallthru
          _
        // Predicated region
        $region29: #{tpu_custom_call.1} parent=11 // pred_check
          %p349 = pneg %p160
        $region30: #{tpu_custom_call.1} parent=11 // pred_check_branch
          %351 = sbr.rel (%p349) target = $region32
        $region31: #{tpu_custom_call.1} parent=11 // pred_region
          %353 = vsyncadd [#allocation6], 0
          %s354 = sshll.u32 %s5, 4
          %s355 = int_to_ptr.hbm [resolvable:$true] %s354
          %s356 = sshll.u32 [#allocation5], 4
          %s357 = int_to_ptr.vmem [resolvable:$true] %s356
          %362 = dma.hbm_to_vmem [thread:$0]  %s355, 512, %s357, [#allocation6], 256, 256, 16
        $region32: #{tpu_custom_call.1} parent=11 // pred_fallthru
          _
        // Predicated region
        $region33: #{tpu_custom_call.1} parent=11 // pred_check
          %p363 = pneg %p181
        $region34: #{tpu_custom_call.1} parent=11 // pred_check_branch
          %365 = sbr.rel (%p363) target = $region36
        $region35: #{tpu_custom_call.1} parent=11 // pred_region
          _
        $region36: #{tpu_custom_call.1} parent=11 // pred_fallthru
          _
      $region12: #{tpu_custom_call.1} parent=5 // pred_fallthru
        _
      %p366 = scmp.lt.s32.totalorder %s29, 2
      // Predicated region
      $region37: #{tpu_custom_call.1} parent=5 // pred_check
        %p367 = pneg %p366
      $region38: #{tpu_custom_call.1} parent=5 // pred_check_branch
        %369 = sbr.rel (%p367) target = $region40
      $region39: #{tpu_custom_call.1} parent=5 // pred_region
        // Predicated region
        $region41: #{tpu_custom_call.1} parent=39 // pred_check
          %p370 = pneg %p49
        $region42: #{tpu_custom_call.1} parent=39 // pred_check_branch
          %372 = sbr.rel (%p370) target = $region44
        $region43: #{tpu_custom_call.1} parent=39 // pred_region
          %p373 = scmp.lt.s32.totalorder %s29, 1
          %s374 = scalar_select %p373, %s29, 1
          %s375 = smul.addr %s374, 2
          %s376 = smul.addr %s375, 8
          %s377 = scalar_lea.vmem %s0, %s376
        $region44: #{tpu_custom_call.1} parent=39 // pred_fallthru
          _
      $region40: #{tpu_custom_call.1} parent=5 // pred_fallthru
        _
      %p378 = scmp.le.s32.totalorder 1, %s29
      %p379 = scmp.lt.s32.totalorder %s29, 3
      %p380 = pnand %p378, %p379
      %p381 = pneg %p380
      // Predicated region
      $region45: #{tpu_custom_call.1} parent=5 // pred_check
        _
      $region46: #{tpu_custom_call.1} parent=5 // pred_check_branch
        %383 = sbr.rel (%p380) target = $region48
      $region47: #{tpu_custom_call.1} parent=5 // pred_region
        %s384 = ssub.s32 %s29, 1
        // Predicated region
        $region49: #{tpu_custom_call.1} parent=47 // pred_check
          %p385 = pneg %p118
        $region50: #{tpu_custom_call.1} parent=47 // pred_check_branch
          %387 = sbr.rel (%p385) target = $region52
        $region51: #{tpu_custom_call.1} parent=47 // pred_region
          %389 = dma.done [#allocation3], 256
        $region52: #{tpu_custom_call.1} parent=47 // pred_fallthru
          _
        // Predicated region
        $region53: #{tpu_custom_call.1} parent=47 // pred_check
          %p390 = pneg %p160
        $region54: #{tpu_custom_call.1} parent=47 // pred_check_branch
          %392 = sbr.rel (%p390) target = $region56
        $region55: #{tpu_custom_call.1} parent=47 // pred_region
          %394 = dma.done [#allocation6], 512
        $region56: #{tpu_custom_call.1} parent=47 // pred_fallthru
          _
        %p395 = scmp.lt.s32.totalorder %s34, 1
        %s396 = scalar_select %p395, %s34, 1
        %s397 = smul.addr %s396, 2
        %s398 = smul.addr %s397, 8
        %s399 = scalar_lea.vmem %s0, %s398
        %p400 = pneg %p55
        %p401 = pneg %p52
        %p402 = pneg %p76
        %p403 = pneg %p73
        %p404 = pneg %p97
        %p405 = pneg %p94
        %p406 = pneg %p118
        %p407 = pneg %p115
        %p408 = pneg %p139
        %p409 = pneg %p136
        %p410 = pneg %p160
        %p411 = pneg %p157
        %p412 = pneg %p181
        %p413 = pneg %p178
        %p414 = pneg %p207
        %p415 = pneg %p204
        %s416 = sand.u32 %s194, 1
        %s417 = scalar_lea.sflag [#allocation4], %s416
        %s418 = sand.u32 %s194, 1
        %s419 = smul.addr %s418, 16
        %s420 = scalar_lea.vmem [#allocation7], %s419
        %p421 = pneg %p233
        %p422 = pneg %p230
        %s423 = sand.u32 %s34, 1
        %s424 = scalar_lea.sflag [#allocation9], %s423
        %s425 = sand.u32 %s220, 1
        %s426 = smul.addr %s425, 16
        %s427 = scalar_lea.vmem [#allocation8], %s426
        %p428 = pneg %p259
        %p429 = pneg %p256
        %s430 = sand.u32 %s34, 1
        %s431 = scalar_lea.sflag [#allocation9], %s430
        %s432 = sand.u32 %s246, 1
        %s433 = smul.addr %s432, 32
        %s434 = scalar_lea.vmem [#allocation10], %s433
        %p435 = pneg %p285
        %p436 = pneg %p282
        %s437 = sand.u32 %s34, 1
        %s438 = scalar_lea.sflag [#allocation12], %s437
        %s439 = sand.u32 %s272, 1
        %s440 = smul.addr %s439, 32
        %s441 = scalar_lea.vmem [#allocation11], %s440
        %p442 = pneg %p311
        %p443 = pneg %p308
        %s444 = sand.u32 %s34, 1
        %s445 = scalar_lea.sflag [#allocation12], %s444
        %s446 = sand.u32 %s298, 1
        %s447 = smul.addr %s446, 32
        %s448 = scalar_lea.vmem [#allocation13], %s447
        %p449 = scmp.lt.s32.totalorder %s34, 1
        %s450 = scalar_select %p449, %s34, 1
        %s451 = smul.addr %s450, 2
        %s452 = smul.addr %s451, 8
        %s453 = scalar_lea.vmem %s0, %s452
        %v454 = vlaneseq
        %v455 = vand.u32 %v454, 127
        %v456 = vadd.s32 %v455, 128
        %v457 = vcvt.s32.f32 %v455
        %v458 = vcvt.s32.f32 %v456
        %v459 = vrcp.pop 16.0
        %v460 = vmul.f32 16.0, %v459
        %v461 = vsub.f32 1.0, %v460
        %v462 = vmul.f32 %v459, %v461
        %v463 = vadd.f32 %v459, %v462
        %vm464 = vweird.f32 %v459
        %v465 = vsel %vm464, %v459, %v463
        %v466 = vmul.f32 %v457, %v465
        %v467 = vmul.f32 %v458, %v465
        %v468 = vfloor.f32 %v466
        %v469 = vfloor.f32 %v467
        %v470 = vmul.f32 %v468, 16.0
        %v471 = vmul.f32 %v469, 16.0
        %v472 = vsub.f32 %v457, %v470
        %v473 = vsub.f32 %v458, %v471
        %vm474 = vcmp.ge.s32.totalorder %v455, 16
        %vm475 = vcmp.ge.s32.totalorder %v456, 16
        %vm476 = vcmp.lt.s32.totalorder %v455, 240
        %vm477 = vcmp.lt.s32.totalorder %v456, 240
        %vm478 = vcmp.ge.f32.partialorder %v472, 0.5
        %vm479 = vcmp.ge.f32.partialorder %v473, 0.5
        %vm480 = vcmp.le.f32.partialorder %v472, 14.5
        %vm481 = vcmp.le.f32.partialorder %v473, 14.5
        %vm482 = vmand %vm474, %vm478
        %vm483 = vmand %vm475, %vm479
        %vm484 = vmand %vm474, %vm480
        %vm485 = vmand %vm475, %vm481
        %vm486 = vmand %vm476, %vm478
        %vm487 = vmand %vm477, %vm479
        %vm488 = vmand %vm476, %vm480
        %vm489 = vmand %vm477, %vm481
        %v490 = vld [vmem:[%s453] sm:$0xff]
        %v491 = vld [vmem:[%s453 + $0x8] sm:$0xff]
        %492 = vrot.lane.b32.xlu0 %v490, 17
        %v493 = vpop.permute.xlu0 %492
        %494 = vrot.lane.b32.xlu0 %v491, 17
        %v495 = vpop.permute.xlu0 %494
        %vm496 = vcmp.lt.s32.totalorder %v455, 17
        %v497 = vsel %vm496, %v493, %v495
        %v498 = vsel %vm496, %v495, %v493
        %v499 = vsel %vm482, 1, 0
        %v500 = vsel %vm483, 1, 0
        %vm501 = vcmp.eq.s32.totalorder %v499, 1
        %vm502 = vcmp.eq.s32.totalorder %v500, 1
        %v503 = vsel %vm501, %v498, 0.0
        %v504 = vsel %vm502, %v497, 0.0
        %505 = vrot.lane.b32.xlu0 %v490, 16
        %v506 = vpop.permute.xlu0 %505
        %507 = vrot.lane.b32.xlu0 %v491, 16
        %v508 = vpop.permute.xlu0 %507
        %vm509 = vcmp.lt.s32.totalorder %v455, 16
        %v510 = vsel %vm509, %v506, %v508
        %v511 = vsel %vm509, %v508, %v506
        %v512 = vsel %vm474, 1, 0
        %v513 = vsel %vm475, 1, 0
        %vm514 = vcmp.eq.s32.totalorder %v512, 1
        %vm515 = vcmp.eq.s32.totalorder %v513, 1
        %v516 = vsel %vm514, %v511, 0.0
        %v517 = vsel %vm515, %v510, 0.0
        %518 = vrot.lane.b32.xlu0 %v490, 15
        %v519 = vpop.permute.xlu0 %518
        %520 = vrot.lane.b32.xlu0 %v491, 15
        %v521 = vpop.permute.xlu0 %520
        %vm522 = vcmp.lt.s32.totalorder %v455, 15
        %v523 = vsel %vm522, %v519, %v521
        %v524 = vsel %vm522, %v521, %v519
        %v525 = vsel %vm484, 1, 0
        %v526 = vsel %vm485, 1, 0
        %vm527 = vcmp.eq.s32.totalorder %v525, 1
        %vm528 = vcmp.eq.s32.totalorder %v526, 1
        %v529 = vsel %vm527, %v524, 0.0
        %v530 = vsel %vm528, %v523, 0.0
        %531 = vrot.lane.b32.xlu0 %v490, 1
        %v532 = vpop.permute.xlu0 %531
        %533 = vrot.lane.b32.xlu0 %v491, 1
        %v534 = vpop.permute.xlu0 %533
        %vm535 = vcmp.lt.s32.totalorder %v455, 1
        %v536 = vsel %vm535, %v532, %v534
        %v537 = vsel %vm535, %v534, %v532
        %v538 = vsel %vm478, 1, 0
        %v539 = vsel %vm479, 1, 0
        %vm540 = vcmp.eq.s32.totalorder %v538, 1
        %vm541 = vcmp.eq.s32.totalorder %v539, 1
        %v542 = vsel %vm540, %v537, 0.0
        %v543 = vsel %vm541, %v536, 0.0
        %544 = vrot.lane.b32.xlu0 %v490, 127
        %v545 = vpop.permute.xlu0 %544
        %546 = vrot.lane.b32.xlu0 %v491, 127
        %v547 = vpop.permute.xlu0 %546
        %vm548 = vcmp.lt.s32.totalorder %v455, 127
        %v549 = vsel %vm548, %v545, %v547
        %v550 = vsel %vm548, %v547, %v545
        %v551 = vsel %vm480, 1, 0
        %v552 = vsel %vm481, 1, 0
        %vm553 = vcmp.eq.s32.totalorder %v551, 1
        %vm554 = vcmp.eq.s32.totalorder %v552, 1
        %v555 = vsel %vm553, %v549, 0.0
        %v556 = vsel %vm554, %v550, 0.0
        %557 = vrot.lane.b32.xlu0 %v490, 113
        %v558 = vpop.permute.xlu0 %557
        %559 = vrot.lane.b32.xlu0 %v491, 113
        %v560 = vpop.permute.xlu0 %559
        %vm561 = vcmp.lt.s32.totalorder %v455, 113
        %v562 = vsel %vm561, %v558, %v560
        %v563 = vsel %vm561, %v560, %v558
        %v564 = vsel %vm486, 1, 0
        %v565 = vsel %vm487, 1, 0
        %vm566 = vcmp.eq.s32.totalorder %v564, 1
        %vm567 = vcmp.eq.s32.totalorder %v565, 1
        %v568 = vsel %vm566, %v562, 0.0
        %v569 = vsel %vm567, %v563, 0.0
        %570 = vrot.lane.b32.xlu0 %v490, 112
        %v571 = vpop.permute.xlu0 %570
        %572 = vrot.lane.b32.xlu0 %v491, 112
        %v573 = vpop.permute.xlu0 %572
        %vm574 = vcmp.lt.s32.totalorder %v455, 112
        %v575 = vsel %vm574, %v571, %v573
        %v576 = vsel %vm574, %v573, %v571
        %v577 = vsel %vm476, 1, 0
        %v578 = vsel %vm477, 1, 0
        %vm579 = vcmp.eq.s32.totalorder %v577, 1
        %vm580 = vcmp.eq.s32.totalorder %v578, 1
        %v581 = vsel %vm579, %v575, 0.0
        %v582 = vsel %vm580, %v576, 0.0
        %583 = vrot.lane.b32.xlu0 %v490, 111
        %v584 = vpop.permute.xlu0 %583
        %585 = vrot.lane.b32.xlu0 %v491, 111
        %v586 = vpop.permute.xlu0 %585
        %vm587 = vcmp.lt.s32.totalorder %v455, 111
        %v588 = vsel %vm587, %v584, %v586
        %v589 = vsel %vm587, %v586, %v584
        %v590 = vsel %vm488, 1, 0
        %v591 = vsel %vm489, 1, 0
        %vm592 = vcmp.eq.s32.totalorder %v590, 1
        %vm593 = vcmp.eq.s32.totalorder %v591, 1
        %v594 = vsel %vm592, %v588, 0.0
        %v595 = vsel %vm593, %v589, 0.0
        %v596 = vld [vmem:[%s1] sm:$0xff]
        %v597 = vld [vmem:[%s2] sm:$0xff]
        %599 = vset.pattern.permute.xlu0 0
        %600 = vperm.xlu0 %599, %v597
        %v601 = vpop.permute.xlu0 %600
        %vm603 = vcmask 588800
        %v605 = vsel %vm603, %v596, 0
        %607 = vmatpush.msra.mxu0 0.0
        %608 = vmatpush.msra.mxu0 0.0
        %609 = vmatpush.msra.mxu0 0.0
        %610 = vmatpush.msra.mxu0 0.0
        %611 = vmatpush.msra.mxu0 0.0
        %612 = vmatpush.msra.mxu0 0.0
        %613 = vmatpush.msra.mxu0 0.0
        %614 = vmatpush.msra.mxu0 %v594
        %615 = vmatpush.msra.mxu0 %v581
        %616 = vmatpush.msra.mxu0 %v568
        %617 = vmatpush.msra.mxu0 %v555
        %618 = vmatpush.msra.mxu0 %v490
        %619 = vmatpush.msra.mxu0 %v542
        %620 = vmatpush.msra.mxu0 %v529
        %621 = vmatpush.msra.mxu0 %v516
        %622 = vmatpush.msra.mxu0 %v503
        %623 = vmatmul.f32.gmra.mxu0 %v605
        %v624 = vpop.f32.mrf.mxu0
        %v625 = vadd.f32 %v601, %v624
        %626 = vdwg.mxu0
        %627 = vmatpush.msra.mxu0 0.0
        %628 = vmatpush.msra.mxu0 0.0
        %629 = vmatpush.msra.mxu0 0.0
        %630 = vmatpush.msra.mxu0 0.0
        %631 = vmatpush.msra.mxu0 0.0
        %632 = vmatpush.msra.mxu0 0.0
        %633 = vmatpush.msra.mxu0 0.0
        %634 = vmatpush.msra.mxu0 %v595
        %635 = vmatpush.msra.mxu0 %v582
        %636 = vmatpush.msra.mxu0 %v569
        %637 = vmatpush.msra.mxu0 %v556
        %638 = vmatpush.msra.mxu0 %v491
        %639 = vmatpush.msra.mxu0 %v543
        %640 = vmatpush.msra.mxu0 %v530
        %641 = vmatpush.msra.mxu0 %v517
        %642 = vmatpush.msra.mxu0 %v504
        %643 = vmatmul.f32.gmra.mxu0 %v605
        %v644 = vpop.f32.mrf.mxu0
        %v645 = vadd.f32 %v601, %v644
        %646 = vdwg.mxu0
        %647 = vst [vmem:[%s420] sm:$0xff] %v625
        %648 = vst [vmem:[%s420 + $0x8] sm:$0xff] %v645
        %v649 = vmax.f32 %v625, 0.0
        %v650 = vmax.f32 %v645, 0.0
        %651 = vst [vmem:[%s427] sm:$0xff] %v649
        %652 = vst [vmem:[%s427 + $0x8] sm:$0xff] %v650
        %653 = vrot.lane.b32.xlu0 %v649, 17
        %v654 = vpop.permute.xlu0 %653
        %655 = vrot.lane.b32.xlu0 %v650, 17
        %v656 = vpop.permute.xlu0 %655
        %v657 = vsel %vm496, %v654, %v656
        %v658 = vsel %vm496, %v656, %v654
        %v659 = vsel %vm501, %v658, 0.0
        %v660 = vsel %vm502, %v657, 0.0
        %661 = vrot.lane.b32.xlu0 %v649, 16
        %v662 = vpop.permute.xlu0 %661
        %663 = vrot.lane.b32.xlu0 %v650, 16
        %v664 = vpop.permute.xlu0 %663
        %v665 = vsel %vm509, %v662, %v664
        %v666 = vsel %vm509, %v664, %v662
        %v667 = vsel %vm514, %v666, 0.0
        %v668 = vsel %vm515, %v665, 0.0
        %669 = vrot.lane.b32.xlu0 %v649, 15
        %v670 = vpop.permute.xlu0 %669
        %671 = vrot.lane.b32.xlu0 %v650, 15
        %v672 = vpop.permute.xlu0 %671
        %v673 = vsel %vm522, %v670, %v672
        %v674 = vsel %vm522, %v672, %v670
        %v675 = vsel %vm527, %v674, 0.0
        %v676 = vsel %vm528, %v673, 0.0
        %677 = vrot.lane.b32.xlu0 %v649, 1
        %v678 = vpop.permute.xlu0 %677
        %679 = vrot.lane.b32.xlu0 %v650, 1
        %v680 = vpop.permute.xlu0 %679
        %v681 = vsel %vm535, %v678, %v680
        %v682 = vsel %vm535, %v680, %v678
        %v683 = vsel %vm540, %v682, 0.0
        %v684 = vsel %vm541, %v681, 0.0
        %685 = vrot.lane.b32.xlu0 %v649, 127
        %v686 = vpop.permute.xlu0 %685
        %687 = vrot.lane.b32.xlu0 %v650, 127
        %v688 = vpop.permute.xlu0 %687
        %v689 = vsel %vm548, %v686, %v688
        %v690 = vsel %vm548, %v688, %v686
        %v691 = vsel %vm553, %v689, 0.0
        %v692 = vsel %vm554, %v690, 0.0
        %693 = vrot.lane.b32.xlu0 %v649, 113
        %v694 = vpop.permute.xlu0 %693
        %695 = vrot.lane.b32.xlu0 %v650, 113
        %v696 = vpop.permute.xlu0 %695
        %v697 = vsel %vm561, %v694, %v696
        %v698 = vsel %vm561, %v696, %v694
        %v699 = vsel %vm566, %v697, 0.0
        %v700 = vsel %vm567, %v698, 0.0
        %701 = vrot.lane.b32.xlu0 %v649, 112
        %v702 = vpop.permute.xlu0 %701
        %703 = vrot.lane.b32.xlu0 %v650, 112
        %v704 = vpop.permute.xlu0 %703
        %v705 = vsel %vm574, %v702, %v704
        %v706 = vsel %vm574, %v704, %v702
        %v707 = vsel %vm579, %v705, 0.0
        %v708 = vsel %vm580, %v706, 0.0
        %709 = vrot.lane.b32.xlu0 %v649, 111
        %v710 = vpop.permute.xlu0 %709
        %711 = vrot.lane.b32.xlu0 %v650, 111
        %v712 = vpop.permute.xlu0 %711
        %v713 = vsel %vm587, %v710, %v712
        %v714 = vsel %vm587, %v712, %v710
        %v715 = vsel %vm592, %v713, 0.0
        %v716 = vsel %vm593, %v714, 0.0
        %v717 = vld [vmem:[#allocation2] sm:$0xff]
        %v718 = vld [vmem:[#allocation2 + $0x8] sm:$0xff]
        %v719 = vld [vmem:[%s4] sm:$0xff]
        %v720 = vld [vmem:[%s4 + $0x8] sm:$0xff]
        %722 = vset.pattern.permute.xlu0 0
        %723 = vperm.xlu0 %722, %v719
        %v724 = vpop.permute.xlu0 %723
        %727 = vset.pattern.permute.xlu0 0
        %728 = vperm.xlu0 %727, %v720
        %v729 = vpop.permute.xlu0 %728
        %v732 = vsel %vm603, %v717, 0
        %v735 = vsel %vm603, %v718, 0
        %737 = vmatpush.msra.mxu0 0.0
        %738 = vmatpush.msra.mxu0 0.0
        %739 = vmatpush.msra.mxu0 0.0
        %740 = vmatpush.msra.mxu0 0.0
        %741 = vmatpush.msra.mxu0 0.0
        %742 = vmatpush.msra.mxu0 0.0
        %743 = vmatpush.msra.mxu0 0.0
        %744 = vmatpush.msra.mxu0 %v715
        %745 = vmatpush.msra.mxu0 %v707
        %746 = vmatpush.msra.mxu0 %v699
        %747 = vmatpush.msra.mxu0 %v691
        %748 = vmatpush.msra.mxu0 %v649
        %749 = vmatpush.msra.mxu0 %v683
        %750 = vmatpush.msra.mxu0 %v675
        %751 = vmatpush.msra.mxu0 %v667
        %752 = vmatpush.msra.mxu0 %v659
        %753 = vmatmul.f32.gmra.mxu0 %v732
        %v754 = vpop.f32.mrf.mxu0
        %v755 = vadd.f32 %v724, %v754
        %756 = vmatmul.f32.gmra.mxu0 %v735
        %v757 = vpop.f32.mrf.mxu0
        %v758 = vadd.f32 %v729, %v757
        %759 = vdwg.mxu0
        %760 = vmatpush.msra.mxu0 0.0
        %761 = vmatpush.msra.mxu0 0.0
        %762 = vmatpush.msra.mxu0 0.0
        %763 = vmatpush.msra.mxu0 0.0
        %764 = vmatpush.msra.mxu0 0.0
        %765 = vmatpush.msra.mxu0 0.0
        %766 = vmatpush.msra.mxu0 0.0
        %767 = vmatpush.msra.mxu0 %v716
        %768 = vmatpush.msra.mxu0 %v708
        %769 = vmatpush.msra.mxu0 %v700
        %770 = vmatpush.msra.mxu0 %v692
        %771 = vmatpush.msra.mxu0 %v650
        %772 = vmatpush.msra.mxu0 %v684
        %773 = vmatpush.msra.mxu0 %v676
        %774 = vmatpush.msra.mxu0 %v668
        %775 = vmatpush.msra.mxu0 %v660
        %776 = vmatmul.f32.gmra.mxu0 %v732
        %v777 = vpop.f32.mrf.mxu0
        %v778 = vadd.f32 %v724, %v777
        %779 = vmatmul.f32.gmra.mxu0 %v735
        %v780 = vpop.f32.mrf.mxu0
        %v781 = vadd.f32 %v729, %v780
        %782 = vdwg.mxu0
        %783 = vst [vmem:[%s434] sm:$0xff] %v755
        %784 = vst [vmem:[%s434 + $0x8] sm:$0xff] %v778
        %785 = vst [vmem:[%s434 + $0x10] sm:$0xff] %v758
        %786 = vst [vmem:[%s434 + $0x18] sm:$0xff] %v781
        %v787 = vmax.f32 %v755, 0.0
        %v788 = vmax.f32 %v778, 0.0
        %v789 = vmax.f32 %v758, 0.0
        %v790 = vmax.f32 %v781, 0.0
        %791 = vst [vmem:[%s441] sm:$0xff] %v787
        %792 = vst [vmem:[%s441 + $0x8] sm:$0xff] %v788
        %793 = vst [vmem:[%s441 + $0x10] sm:$0xff] %v789
        %794 = vst [vmem:[%s441 + $0x18] sm:$0xff] %v790
        %795 = vrot.lane.b32.xlu0 %v787, 17
        %v796 = vpop.permute.xlu0 %795
        %797 = vrot.lane.b32.xlu0 %v789, 17
        %v798 = vpop.permute.xlu0 %797
        %799 = vrot.lane.b32.xlu0 %v788, 17
        %v800 = vpop.permute.xlu0 %799
        %801 = vrot.lane.b32.xlu0 %v790, 17
        %v802 = vpop.permute.xlu0 %801
        %v803 = vsel %vm496, %v796, %v800
        %v804 = vsel %vm496, %v798, %v802
        %v805 = vsel %vm496, %v800, %v796
        %v806 = vsel %vm496, %v802, %v798
        %v807 = vsel %vm501, %v805, 0.0
        %v808 = vsel %vm502, %v803, 0.0
        %v809 = vsel %vm501, %v806, 0.0
        %v810 = vsel %vm502, %v804, 0.0
        %811 = vrot.lane.b32.xlu0 %v787, 16
        %v812 = vpop.permute.xlu0 %811
        %813 = vrot.lane.b32.xlu0 %v789, 16
        %v814 = vpop.permute.xlu0 %813
        %815 = vrot.lane.b32.xlu0 %v788, 16
        %v816 = vpop.permute.xlu0 %815
        %817 = vrot.lane.b32.xlu0 %v790, 16
        %v818 = vpop.permute.xlu0 %817
        %v819 = vsel %vm509, %v812, %v816
        %v820 = vsel %vm509, %v814, %v818
        %v821 = vsel %vm509, %v816, %v812
        %v822 = vsel %vm509, %v818, %v814
        %v823 = vsel %vm514, %v821, 0.0
        %v824 = vsel %vm515, %v819, 0.0
        %v825 = vsel %vm514, %v822, 0.0
        %v826 = vsel %vm515, %v820, 0.0
        %827 = vrot.lane.b32.xlu0 %v787, 15
        %v828 = vpop.permute.xlu0 %827
        %829 = vrot.lane.b32.xlu0 %v789, 15
        %v830 = vpop.permute.xlu0 %829
        %831 = vrot.lane.b32.xlu0 %v788, 15
        %v832 = vpop.permute.xlu0 %831
        %833 = vrot.lane.b32.xlu0 %v790, 15
        %v834 = vpop.permute.xlu0 %833
        %v835 = vsel %vm522, %v828, %v832
        %v836 = vsel %vm522, %v830, %v834
        %v837 = vsel %vm522, %v832, %v828
        %v838 = vsel %vm522, %v834, %v830
        %v839 = vsel %vm527, %v837, 0.0
        %v840 = vsel %vm528, %v835, 0.0
        %v841 = vsel %vm527, %v838, 0.0
        %v842 = vsel %vm528, %v836, 0.0
        %843 = vrot.lane.b32.xlu0 %v787, 1
        %v844 = vpop.permute.xlu0 %843
        %845 = vrot.lane.b32.xlu0 %v789, 1
        %v846 = vpop.permute.xlu0 %845
        %847 = vrot.lane.b32.xlu0 %v788, 1
        %v848 = vpop.permute.xlu0 %847
        %849 = vrot.lane.b32.xlu0 %v790, 1
        %v850 = vpop.permute.xlu0 %849
        %v851 = vsel %vm535, %v844, %v848
        %v852 = vsel %vm535, %v846, %v850
        %v853 = vsel %vm535, %v848, %v844
        %v854 = vsel %vm535, %v850, %v846
        %v855 = vsel %vm540, %v853, 0.0
        %v856 = vsel %vm541, %v851, 0.0
        %v857 = vsel %vm540, %v854, 0.0
        %v858 = vsel %vm541, %v852, 0.0
        %859 = vrot.lane.b32.xlu0 %v787, 127
        %v860 = vpop.permute.xlu0 %859
        %861 = vrot.lane.b32.xlu0 %v789, 127
        %v862 = vpop.permute.xlu0 %861
        %863 = vrot.lane.b32.xlu0 %v788, 127
        %v864 = vpop.permute.xlu0 %863
        %865 = vrot.lane.b32.xlu0 %v790, 127
        %v866 = vpop.permute.xlu0 %865
        %v867 = vsel %vm548, %v860, %v864
        %v868 = vsel %vm548, %v862, %v866
        %v869 = vsel %vm548, %v864, %v860
        %v870 = vsel %vm548, %v866, %v862
        %v871 = vsel %vm553, %v867, 0.0
        %v872 = vsel %vm554, %v869, 0.0
        %v873 = vsel %vm553, %v868, 0.0
        %v874 = vsel %vm554, %v870, 0.0
        %875 = vrot.lane.b32.xlu0 %v787, 113
        %v876 = vpop.permute.xlu0 %875
        %877 = vrot.lane.b32.xlu0 %v789, 113
        %v878 = vpop.permute.xlu0 %877
        %879 = vrot.lane.b32.xlu0 %v788, 113
        %v880 = vpop.permute.xlu0 %879
        %881 = vrot.lane.b32.xlu0 %v790, 113
        %v882 = vpop.permute.xlu0 %881
        %v883 = vsel %vm561, %v876, %v880
        %v884 = vsel %vm561, %v878, %v882
        %v885 = vsel %vm561, %v880, %v876
        %v886 = vsel %vm561, %v882, %v878
        %v887 = vsel %vm566, %v883, 0.0
        %v888 = vsel %vm567, %v885, 0.0
        %v889 = vsel %vm566, %v884, 0.0
        %v890 = vsel %vm567, %v886, 0.0
        %891 = vrot.lane.b32.xlu0 %v787, 112
        %v892 = vpop.permute.xlu0 %891
        %893 = vrot.lane.b32.xlu0 %v789, 112
        %v894 = vpop.permute.xlu0 %893
        %895 = vrot.lane.b32.xlu0 %v788, 112
        %v896 = vpop.permute.xlu0 %895
        %897 = vrot.lane.b32.xlu0 %v790, 112
        %v898 = vpop.permute.xlu0 %897
        %v899 = vsel %vm574, %v892, %v896
        %v900 = vsel %vm574, %v894, %v898
        %v901 = vsel %vm574, %v896, %v892
        %v902 = vsel %vm574, %v898, %v894
        %v903 = vsel %vm579, %v899, 0.0
        %v904 = vsel %vm580, %v901, 0.0
        %v905 = vsel %vm579, %v900, 0.0
        %v906 = vsel %vm580, %v902, 0.0
        %907 = vrot.lane.b32.xlu0 %v787, 111
        %v908 = vpop.permute.xlu0 %907
        %909 = vrot.lane.b32.xlu0 %v789, 111
        %v910 = vpop.permute.xlu0 %909
        %911 = vrot.lane.b32.xlu0 %v788, 111
        %v912 = vpop.permute.xlu0 %911
        %913 = vrot.lane.b32.xlu0 %v790, 111
        %v914 = vpop.permute.xlu0 %913
        %v915 = vsel %vm587, %v908, %v912
        %v916 = vsel %vm587, %v910, %v914
        %v917 = vsel %vm587, %v912, %v908
        %v918 = vsel %vm587, %v914, %v910
        %v919 = vsel %vm592, %v915, 0.0
        %v920 = vsel %vm593, %v917, 0.0
        %v921 = vsel %vm592, %v916, 0.0
        %v922 = vsel %vm593, %v918, 0.0
        %v923 = vld [vmem:[#allocation5] sm:$0xff]
        %v924 = vld [vmem:[#allocation5 + $0x8] sm:$0xff]
        %v925 = vld [vmem:[#allocation5 + $0x10] sm:$0xff]
        %v926 = vld [vmem:[#allocation5 + $0x18] sm:$0xff]
        %v927 = vld [vmem:[%s6] sm:$0xff]
        %v928 = vld [vmem:[%s6 + $0x8] sm:$0xff]
        %930 = vset.pattern.permute.xlu0 0
        %931 = vperm.xlu0 %930, %v927
        %v932 = vpop.permute.xlu0 %931
        %935 = vset.pattern.permute.xlu0 0
        %936 = vperm.xlu0 %935, %v928
        %v937 = vpop.permute.xlu0 %936
        %vm939 = vcmask 130048
        %v941 = vsel %vm939, %v924, 0
        %v944 = vsel %vm939, %v926, 0
        %946 = vmatpush.msra.mxu0 %v905
        %947 = vmatpush.msra.mxu0 %v903
        %948 = vmatpush.msra.mxu0 %v889
        %949 = vmatpush.msra.mxu0 %v887
        %950 = vmatpush.msra.mxu0 %v873
        %951 = vmatpush.msra.mxu0 %v871
        %952 = vmatpush.msra.mxu0 %v789
        %953 = vmatpush.msra.mxu0 %v787
        %954 = vmatpush.msra.mxu0 %v857
        %955 = vmatpush.msra.mxu0 %v855
        %956 = vmatpush.msra.mxu0 %v841
        %957 = vmatpush.msra.mxu0 %v839
        %958 = vmatpush.msra.mxu0 %v825
        %959 = vmatpush.msra.mxu0 %v823
        %960 = vmatpush.msra.mxu0 %v809
        %961 = vmatpush.msra.mxu0 %v807
        %962 = vmatmul.f32.gmra.mxu0 %v923
        %v963 = vpop.f32.mrf.mxu0
        %v964 = vadd.f32 %v932, %v963
        %965 = vmatmul.f32.gmra.mxu0 %v925
        %v966 = vpop.f32.mrf.mxu0
        %v967 = vadd.f32 %v937, %v966
        %968 = vdwg.mxu0
        %969 = vmatpush.msra.mxu0 0.0
        %970 = vmatpush.msra.mxu0 0.0
        %971 = vmatpush.msra.mxu0 0.0
        %972 = vmatpush.msra.mxu0 0.0
        %973 = vmatpush.msra.mxu0 0.0
        %974 = vmatpush.msra.mxu0 0.0
        %975 = vmatpush.msra.mxu0 0.0
        %976 = vmatpush.msra.mxu0 0.0
        %977 = vmatpush.msra.mxu0 0.0
        %978 = vmatpush.msra.mxu0 0.0
        %979 = vmatpush.msra.mxu0 0.0
        %980 = vmatpush.msra.mxu0 0.0
        %981 = vmatpush.msra.mxu0 0.0
        %982 = vmatpush.msra.mxu0 0.0
        %983 = vmatpush.msra.mxu0 %v921
        %984 = vmatpush.msra.mxu0 %v919
        %985 = vmatmul.f32.gmra.mxu0 %v941
        %v986 = vpop.f32.mrf.mxu0
        %v987 = vadd.f32 %v964, %v986
        %988 = vmatmul.f32.gmra.mxu0 %v944
        %v989 = vpop.f32.mrf.mxu0
        %v990 = vadd.f32 %v967, %v989
        %991 = vdwg.mxu0
        %992 = vmatpush.msra.mxu0 %v906
        %993 = vmatpush.msra.mxu0 %v904
        %994 = vmatpush.msra.mxu0 %v890
        %995 = vmatpush.msra.mxu0 %v888
        %996 = vmatpush.msra.mxu0 %v874
        %997 = vmatpush.msra.mxu0 %v872
        %998 = vmatpush.msra.mxu0 %v790
        %999 = vmatpush.msra.mxu0 %v788
        %1000 = vmatpush.msra.mxu0 %v858
        %1001 = vmatpush.msra.mxu0 %v856
        %1002 = vmatpush.msra.mxu0 %v842
        %1003 = vmatpush.msra.mxu0 %v840
        %1004 = vmatpush.msra.mxu0 %v826
        %1005 = vmatpush.msra.mxu0 %v824
        %1006 = vmatpush.msra.mxu0 %v810
        %1007 = vmatpush.msra.mxu0 %v808
        %1008 = vmatmul.f32.gmra.mxu0 %v923
        %v1009 = vpop.f32.mrf.mxu0
        %v1010 = vadd.f32 %v932, %v1009
        %1011 = vmatmul.f32.gmra.mxu0 %v925
        %v1012 = vpop.f32.mrf.mxu0
        %v1013 = vadd.f32 %v937, %v1012
        %1014 = vdwg.mxu0
        %1015 = vmatpush.msra.mxu0 0.0
        %1016 = vmatpush.msra.mxu0 0.0
        %1017 = vmatpush.msra.mxu0 0.0
        %1018 = vmatpush.msra.mxu0 0.0
        %1019 = vmatpush.msra.mxu0 0.0
        %1020 = vmatpush.msra.mxu0 0.0
        %1021 = vmatpush.msra.mxu0 0.0
        %1022 = vmatpush.msra.mxu0 0.0
        %1023 = vmatpush.msra.mxu0 0.0
        %1024 = vmatpush.msra.mxu0 0.0
        %1025 = vmatpush.msra.mxu0 0.0
        %1026 = vmatpush.msra.mxu0 0.0
        %1027 = vmatpush.msra.mxu0 0.0
        %1028 = vmatpush.msra.mxu0 0.0
        %1029 = vmatpush.msra.mxu0 %v922
        %1030 = vmatpush.msra.mxu0 %v920
        %1031 = vmatmul.f32.gmra.mxu0 %v941
        %v1032 = vpop.f32.mrf.mxu0
        %v1033 = vadd.f32 %v1010, %v1032
        %1034 = vmatmul.f32.gmra.mxu0 %v944
        %v1035 = vpop.f32.mrf.mxu0
        %v1036 = vadd.f32 %v1013, %v1035
        %1037 = vdwg.mxu0
        %1038 = vst [vmem:[%s448] sm:$0xff] %v987
        %1039 = vst [vmem:[%s448 + $0x8] sm:$0xff] %v1033
        %1040 = vst [vmem:[%s448 + $0x10] sm:$0xff] %v990
        %1041 = vst [vmem:[%s448 + $0x18] sm:$0xff] %v1036
        %s1042 = sand.u32 %s194, 1
        %s1043 = scalar_lea.sflag [#allocation4], %s1042
        %s1044 = sand.u32 %s194, 1
        %s1045 = smul.addr %s1044, 16
        %s1046 = scalar_lea.vmem [#allocation7], %s1045
        %s1047 = sand.u32 %s34, 1
        %s1048 = scalar_lea.sflag [#allocation9], %s1047
        %s1049 = sand.u32 %s220, 1
        %s1050 = smul.addr %s1049, 16
        %s1051 = scalar_lea.vmem [#allocation8], %s1050
        %s1052 = sand.u32 %s34, 1
        %s1053 = scalar_lea.sflag [#allocation9], %s1052
        %s1054 = sand.u32 %s246, 1
        %s1055 = smul.addr %s1054, 32
        %s1056 = scalar_lea.vmem [#allocation10], %s1055
        %s1057 = sand.u32 %s34, 1
        %s1058 = scalar_lea.sflag [#allocation12], %s1057
        %s1059 = sand.u32 %s272, 1
        %s1060 = smul.addr %s1059, 32
        %s1061 = scalar_lea.vmem [#allocation11], %s1060
        %s1062 = sand.u32 %s34, 1
        %s1063 = scalar_lea.sflag [#allocation12], %s1062
        %s1064 = sand.u32 %s298, 1
        %s1065 = smul.addr %s1064, 32
        %s1066 = scalar_lea.vmem [#allocation13], %s1065
        // Predicated region
        $region57: #{tpu_custom_call.1} parent=47 // pred_check
          %p1067 = pneg %p204
        $region58: #{tpu_custom_call.1} parent=47 // pred_check_branch
          %1069 = sbr.rel (%p1067) target = $region60
        $region59: #{tpu_custom_call.1} parent=47 // pred_region
          %1071 = vsyncadd %s1043, 0
          %s1072 = smul.addr %s34, 2
          %s1073 = smul.addr %s1072, 8
          %s1074 = scalar_lea.hbm %s7, %s1073
          %s1076 = sshll.u32 %s1046, 4
          %s1077 = int_to_ptr.vmem [resolvable:$true] %s1076
          %s1078 = sshll.u32 %s1074, 4
          %s1079 = int_to_ptr.hbm [resolvable:$true] %s1078
          %1081 = dma.vmem_to_hbm [thread:$0]  %s1077, 256, %s1079, %s1043
        $region60: #{tpu_custom_call.1} parent=47 // pred_fallthru
          _
        // Predicated region
        $region61: #{tpu_custom_call.1} parent=47 // pred_check
          %p1082 = pneg %p230
        $region62: #{tpu_custom_call.1} parent=47 // pred_check_branch
          %1084 = sbr.rel (%p1082) target = $region64
        $region63: #{tpu_custom_call.1} parent=47 // pred_region
          %1086 = vsyncadd %s1048, 0
          %s1087 = smul.addr %s34, 2
          %s1088 = smul.addr %s1087, 8
          %s1089 = scalar_lea.hbm %s8, %s1088
          %s1091 = sshll.u32 %s1051, 4
          %s1092 = int_to_ptr.vmem [resolvable:$true] %s1091
          %s1093 = sshll.u32 %s1089, 4
          %s1094 = int_to_ptr.hbm [resolvable:$true] %s1093
          %1096 = dma.vmem_to_hbm [thread:$0]  %s1092, 256, %s1094, %s1048
        $region64: #{tpu_custom_call.1} parent=47 // pred_fallthru
          _
        // Predicated region
        $region65: #{tpu_custom_call.1} parent=47 // pred_check
          %p1097 = pneg %p256
        $region66: #{tpu_custom_call.1} parent=47 // pred_check_branch
          %1099 = sbr.rel (%p1097) target = $region68
        $region67: #{tpu_custom_call.1} parent=47 // pred_region
          %1101 = vsyncadd %s1053, 0
          %s1102 = smul.addr %s34, 4
          %s1103 = smul.addr %s1102, 8
          %s1104 = scalar_lea.hbm %s9, %s1103
          %s1105 = sshll.u32 %s1056, 4
          %s1106 = int_to_ptr.vmem [resolvable:$true] %s1105
          %s1107 = sshll.u32 %s1104, 4
          %s1108 = int_to_ptr.hbm [resolvable:$true] %s1107
          %1113 = dma.vmem_to_hbm [thread:$0]  %s1106, 512, %s1108, %s1053, 256, 256, 16
        $region68: #{tpu_custom_call.1} parent=47 // pred_fallthru
          _
        // Predicated region
        $region69: #{tpu_custom_call.1} parent=47 // pred_check
          %p1114 = pneg %p282
        $region70: #{tpu_custom_call.1} parent=47 // pred_check_branch
          %1116 = sbr.rel (%p1114) target = $region72
        $region71: #{tpu_custom_call.1} parent=47 // pred_region
          %1118 = vsyncadd %s1058, 0
          %s1119 = smul.addr %s34, 4
          %s1120 = smul.addr %s1119, 8
          %s1121 = scalar_lea.hbm %s10, %s1120
          %s1122 = sshll.u32 %s1061, 4
          %s1123 = int_to_ptr.vmem [resolvable:$true] %s1122
          %s1124 = sshll.u32 %s1121, 4
          %s1125 = int_to_ptr.hbm [resolvable:$true] %s1124
          %1130 = dma.vmem_to_hbm [thread:$0]  %s1123, 512, %s1125, %s1058, 256, 256, 16
        $region72: #{tpu_custom_call.1} parent=47 // pred_fallthru
          _
        // Predicated region
        $region73: #{tpu_custom_call.1} parent=47 // pred_check
          %p1131 = pneg %p308
        $region74: #{tpu_custom_call.1} parent=47 // pred_check_branch
          %1133 = sbr.rel (%p1131) target = $region76
        $region75: #{tpu_custom_call.1} parent=47 // pred_region
          %1135 = vsyncadd %s1063, 0
          %s1136 = smul.addr %s34, 4
          %s1137 = smul.addr %s1136, 8
          %s1138 = scalar_lea.hbm %s11, %s1137
          %s1139 = sshll.u32 %s1066, 4
          %s1140 = int_to_ptr.vmem [resolvable:$true] %s1139
          %s1141 = sshll.u32 %s1138, 4
          %s1142 = int_to_ptr.hbm [resolvable:$true] %s1141
          %1147 = dma.vmem_to_hbm [thread:$0]  %s1140, 512, %s1142, %s1063, 256, 256, 16
        $region76: #{tpu_custom_call.1} parent=47 // pred_fallthru
          _
      $region48: #{tpu_custom_call.1} parent=5 // pred_fallthru
        _
      %p1148 = scmp.le.s32.totalorder 2, %s29
      // Predicated region
      $region77: #{tpu_custom_call.1} parent=5 // pred_check
        %p1149 = pneg %p1148
      $region78: #{tpu_custom_call.1} parent=5 // pred_check_branch
        %1151 = sbr.rel (%p1149) target = $region80
      $region79: #{tpu_custom_call.1} parent=5 // pred_region
        %s1152 = ssub.s32 %s29, 2
        // Predicated region
        $region81: #{tpu_custom_call.1} parent=79 // pred_check
          %p1153 = pneg %p210
        $region82: #{tpu_custom_call.1} parent=79 // pred_check_branch
          %1155 = sbr.rel (%p1153) target = $region84
        $region83: #{tpu_custom_call.1} parent=79 // pred_region
          %s1156 = sand.u32 %s195, 1
          %s1157 = scalar_lea.sflag [#allocation4], %s1156
          %s1158 = sand.u32 %s195, 1
          %s1159 = smul.addr %s1158, 16
          %s1160 = scalar_lea.vmem [#allocation7], %s1159
          %1162 = dma.done %s1157, 256
        $region84: #{tpu_custom_call.1} parent=79 // pred_fallthru
          _
        // Predicated region
        $region85: #{tpu_custom_call.1} parent=79 // pred_check
          %p1163 = pneg %p236
        $region86: #{tpu_custom_call.1} parent=79 // pred_check_branch
          %1165 = sbr.rel (%p1163) target = $region88
        $region87: #{tpu_custom_call.1} parent=79 // pred_region
          %s1166 = sand.u32 %s35, 1
          %s1167 = scalar_lea.sflag [#allocation9], %s1166
          %s1168 = sand.u32 %s221, 1
          %s1169 = smul.addr %s1168, 16
          %s1170 = scalar_lea.vmem [#allocation8], %s1169
          %1172 = dma.done %s1167, 256
        $region88: #{tpu_custom_call.1} parent=79 // pred_fallthru
          _
        // Predicated region
        $region89: #{tpu_custom_call.1} parent=79 // pred_check
          %p1173 = pneg %p262
        $region90: #{tpu_custom_call.1} parent=79 // pred_check_branch
          %1175 = sbr.rel (%p1173) target = $region92
        $region91: #{tpu_custom_call.1} parent=79 // pred_region
          %s1176 = sand.u32 %s35, 1
          %s1177 = scalar_lea.sflag [#allocation9], %s1176
          %s1178 = sand.u32 %s247, 1
          %s1179 = smul.addr %s1178, 32
          %s1180 = scalar_lea.vmem [#allocation10], %s1179
          %1182 = dma.done %s1177, 512
        $region92: #{tpu_custom_call.1} parent=79 // pred_fallthru
          _
        // Predicated region
        $region93: #{tpu_custom_call.1} parent=79 // pred_check
          %p1183 = pneg %p288
        $region94: #{tpu_custom_call.1} parent=79 // pred_check_branch
          %1185 = sbr.rel (%p1183) target = $region96
        $region95: #{tpu_custom_call.1} parent=79 // pred_region
          %s1186 = sand.u32 %s35, 1
          %s1187 = scalar_lea.sflag [#allocation12], %s1186
          %s1188 = sand.u32 %s273, 1
          %s1189 = smul.addr %s1188, 32
          %s1190 = scalar_lea.vmem [#allocation11], %s1189
          %1192 = dma.done %s1187, 512
        $region96: #{tpu_custom_call.1} parent=79 // pred_fallthru
          _
        // Predicated region
        $region97: #{tpu_custom_call.1} parent=79 // pred_check
          %p1193 = pneg %p314
        $region98: #{tpu_custom_call.1} parent=79 // pred_check_branch
          %1195 = sbr.rel (%p1193) target = $region100
        $region99: #{tpu_custom_call.1} parent=79 // pred_region
          %s1196 = sand.u32 %s35, 1
          %s1197 = scalar_lea.sflag [#allocation12], %s1196
          %s1198 = sand.u32 %s299, 1
          %s1199 = smul.addr %s1198, 32
          %s1200 = scalar_lea.vmem [#allocation13], %s1199
          %1202 = dma.done %s1197, 512
        $region100: #{tpu_custom_call.1} parent=79 // pred_fallthru
          _
      $region80: #{tpu_custom_call.1} parent=5 // pred_fallthru
        _
    $region6: #{tpu_custom_call.1} parent=1 // loop_footer
      %s33 = sadd.s32 1, %s29
    $region7: #{tpu_custom_call.1} parent=1 // loop_footer_branch
      %28 = sbr.rel target = $region3
    $region8: #{tpu_custom_call.1} parent=1 // loop_exit
      _
    %1203 = vsyncpa [#allocation3], 1
    %s1204 = scalar_lea.sflag [#allocation3], 1
    %1205 = vsyncpa %s1204, 1
    %1206 = vsyncpa [#allocation6], 1
    %1207 = vsyncpa [#allocation4], 1
    %s1208 = scalar_lea.sflag [#allocation4], 1
    %1209 = vsyncpa %s1208, 1
    %1210 = vsyncpa [#allocation9], 1
    %s1211 = scalar_lea.sflag [#allocation9], 1
    %1212 = vsyncpa %s1211, 1
    %1213 = vsyncpa [#allocation12], 1
    %s1214 = scalar_lea.sflag [#allocation12], 1
    %1215 = vsyncpa %s1214, 1

</llo_original>
